<compile_context>
chip_gen: v5e
topology: v5e:2x2
jax: 0.10.0
libtpu: 0.0.40
codegen_flags: <defaults>
</compile_context>

<pallas_src>
import functools
import math

import jax
import jax.numpy as jnp
from jax.experimental import pallas as pl
from jax.experimental.pallas import tpu as pltpu

# Mamba defaults (mamba_ssm Mamba(d_model=hidden_size))
D_MODEL = 32                       # hidden_size
D_STATE = 16                       # d_state
D_CONV = 4                         # d_conv
EXPAND = 2                         # expand
D_INNER = EXPAND * D_MODEL         # 64
DT_RANK = math.ceil(D_MODEL / 16)  # 2
EPS = 1e-5                         # MixerModel norm_epsilon default

# Lane-packed state layout: (D_STATE, D_INNER) = (16, 64) -> (8, 128) dense vreg.
PACK_S = D_STATE // 2              # 8 sublanes
PACK_D = 2 * D_INNER               # 128 lanes
SCAN_CHUNK = 128                   # max timesteps staged per scan chunk

# MXU operand dtype (accumulation is always f32 via preferred_element_type).
MM_DTYPE = jnp.bfloat16


def _rmsnorm(x, w):
    var = jnp.mean(x * x, axis=-1, keepdims=True)
    return x * jax.lax.rsqrt(var + EPS) * w


def _softplus(x):
    return jnp.where(x > 20.0, x, jnp.log1p(jnp.exp(jnp.minimum(x, 20.0))))


def _silu(x):
    return x * jax.nn.sigmoid(x)


# ----------------------------------------------------------------------------
# Fused kernel: all layers + final RMSNorm.  Grid = (batch_blocks, n_layer).
# out_ref (block index depends only on the batch axis) is the VMEM-resident
# activation carried across the layer axis.
# ----------------------------------------------------------------------------
def fused_mamba_kernel(x_ref, norm_w_ref, w_in_ref, w_conv_ref, b_conv_ref,
                       w_proj_ref, b_dt_ref, a_neg_ref, d_ref, w_out_ref,
                       norm_f_ref, out_ref,
                       da_s, dbx_s, h_s, y_s, *, bb, seq_len, n_layer, chunk):
    layer = pl.program_id(1)
    m = bb * seq_len                                        # rows in this batch block

    # Layer 0: pull the embedding block into the resident activation tile.
    @pl.when(layer == 0)
    def _():
        out_ref[...] = x_ref[...]

    x_resid = out_ref[...]                                  # (m, D_MODEL) f32

    # ---- pre-norm RMSNorm ----
    normed = _rmsnorm(x_resid, norm_w_ref[0])               # (m, D_MODEL)

    # ---- in_proj: one (m, D_MODEL) @ (D_MODEL, 2*D_INNER) matmul for the whole block ----
    xz = jnp.dot(normed.astype(MM_DTYPE), w_in_ref[0],
                 preferred_element_type=jnp.float32)        # (m, 2*D_INNER) f32
    x_part = xz[:, :D_INNER]
    z_part = xz[:, D_INNER:]

    # ---- causal depthwise conv1d (kernel D_CONV, left pad D_CONV-1) + SiLU ----
    # TODO(synk): pltpu.roll(axis=0) would move these shifts to the idle XLU slot; kept the
    # proven zero-pad + static-slice lowering since the conv is a tiny fraction of the layer.
    wc = w_conv_ref[0]                                      # (D_CONV, D_INNER) f32
    xpad = jnp.concatenate(
        [jnp.zeros((D_CONV - 1, D_INNER), jnp.float32), x_part], axis=0)
    if bb > 1:
        pos = jax.lax.broadcasted_iota(jnp.int32, (m, D_INNER), 0) % seq_len
    acc = x_part * wc[D_CONV - 1:D_CONV, :]                 # tap j=0 (no shift)
    for j in range(1, D_CONV):
        shifted = xpad[D_CONV - 1 - j:D_CONV - 1 - j + m, :]  # row t -> x[t-j] (0 for t<j)
        if bb > 1:                                          # kill cross-sequence leakage
            shifted = jnp.where(pos >= j, shifted, 0.0)
        acc = acc + shifted * wc[D_CONV - 1 - j:D_CONV - j, :]
    x_conv = _silu(acc + b_conv_ref[0])                     # (m, D_INNER)

    # ---- fused dt / B / C projection: single (m, 64) @ (64, 128) lane-dense matmul ----
    # result layout: [ dt (64) | B (16) | C (16) | pad (32) ]
    proj = jnp.dot(x_conv.astype(MM_DTYPE), w_proj_ref[0],
                   preferred_element_type=jnp.float32)      # (m, 128) f32
    delta = _softplus(proj[:, :D_INNER] + b_dt_ref[0])      # (m, D_INNER)
    b_all = proj[:, D_INNER:D_INNER + D_STATE]              # (m, D_STATE)
    c_all = proj[:, D_INNER + D_STATE:D_INNER + 2 * D_STATE]  # (m, D_STATE)

    a_neg = a_neg_ref[0]                                    # (8, 128) packed; A = -exp(A_log)
    d_param = d_ref[0]                                      # (1, D_INNER)
    dtx = delta * x_conv                                    # (m, D_INNER)

    # ---- chunked, lane-packed selective scan ----
    # h_packed[b*8+p, q] = h[b][s, d] with s = p + 8*(q//64), d = q%64  (dense (8,128) vregs)
    h = jnp.zeros((bb * PACK_S, PACK_D), jnp.float32)
    c0 = 0
    while c0 < seq_len:
        t_sz = min(chunk, seq_len - c0)

        # Stage dA = exp(delta*A) and dB*x for all bb sequences (vectorized over time).
        for b in range(bb):
            r0 = b * seq_len + c0
            d_c = delta[r0:r0 + t_sz]                               # (T, 64)
            dtx_c = dtx[r0:r0 + t_sz]                               # (T, 64)
            d2 = jnp.concatenate([d_c, d_c], axis=1)                # (T, 128)
            da_b = jnp.exp(d2[:, None, :] * a_neg[None, :, :])      # (T, 8, 128)
            b_c = b_all[r0:r0 + t_sz]                               # (T, 16)
            dbx_b = jnp.concatenate(
                [b_c[:, 0:PACK_S, None] * dtx_c[:, None, :],
                 b_c[:, PACK_S:, None] * dtx_c[:, None, :]], axis=2)  # (T, 8, 128)
            da_s[0:t_sz, b * PACK_S:(b + 1) * PACK_S, :] = da_b
            dbx_s[0:t_sz, b * PACK_S:(b + 1) * PACK_S, :] = dbx_b

        # Serial recurrence: 1 vmul + 1 vadd per dense vreg per step; bb chains interleaved.
        def body(t, h_carry):
            h_new = da_s[t] * h_carry + dbx_s[t]
            h_s[t] = h_new
            return h_new

        h = jax.lax.fori_loop(0, t_sz, body, h, unroll=8)

        # y_t = C_t . h_t + D * x_t, vectorized over the chunk, written straight to y_s.
        for b in range(bb):
            r0 = b * seq_len + c0
            h_b = h_s[0:t_sz, b * PACK_S:(b + 1) * PACK_S, :]        # (T, 8, 128)
            c_c = c_all[r0:r0 + t_sz]                                # (T, 16)
            y_c = (jnp.sum(h_b[:, :, :D_INNER] * c_c[:, 0:PACK_S, None], axis=1)
                   + jnp.sum(h_b[:, :, D_INNER:] * c_c[:, PACK_S:, None], axis=1))
            y_s[r0:r0 + t_sz, :] = y_c + d_param * x_conv[r0:r0 + t_sz]

        c0 += t_sz

    # ---- gate, out_proj, residual, (fused final RMSNorm on the last layer) ----
    y = y_s[...] * _silu(z_part)                            # (m, D_INNER)
    mixer_out = jnp.dot(y.astype(MM_DTYPE), w_out_ref[0],
                        preferred_element_type=jnp.float32)  # (m, D_MODEL)
    new_act = x_resid + mixer_out
    is_last = layer == n_layer - 1
    out_ref[...] = jnp.where(is_last, _rmsnorm(new_act, norm_f_ref[...]), new_act)


def _layer_spec(arr):
    nd = arr.ndim
    return pl.BlockSpec((1,) + arr.shape[1:],
                        lambda i, l, _nd=nd: (l,) + (0,) * (_nd - 1))


def _num_tensorcores():
    """1 TC on v2-v6 style chips, 2 TCs on v7x.  Conservative fallback: 1."""
    try:
        kind = jax.devices()[0].device_kind.lower()
    except Exception:
        return 1
    for tag in ("v2", "v3", "v4", "v5", "v6"):
        if tag in kind:
            return 1
    return 2 if "7" in kind else 1


def _physical_vmem_bytes():
    try:
        return int(pltpu.get_tpu_info().vmem_capacity_bytes)
    except Exception:
        return 64 << 20


# ----------------------------------------------------------------------------
# Full forward: embedding lookup (plain JAX glue) + single fused pallas_call.
# ----------------------------------------------------------------------------
def mamba_model_forward(params, tokens):
    B, L = tokens.shape
    n_layer = params["w_in"].shape[0]

    # Embedding lookup is glue (plain JAX gather), flattened to (B*L, D_MODEL) batch-major.
    x2d = jnp.take(params["embedding"], tokens.reshape(-1), axis=0)

    # ---- host-side (per-trace) weight prep ----
    w_x = params["w_x"]                                       # (nl, D_INNER, DT_RANK+2*D_STATE)
    w_dt_fold = jnp.einsum("ldr,lrj->ldj", w_x[:, :, :DT_RANK], params["w_dt"])  # (nl,64,64)
    w_b = w_x[:, :, DT_RANK:DT_RANK + D_STATE]                # (nl, 64, 16)
    w_c = w_x[:, :, DT_RANK + D_STATE:]                       # (nl, 64, 16)
    pad = jnp.zeros((n_layer, D_INNER, PACK_D - (D_INNER + 2 * D_STATE)), jnp.float32)
    w_proj = jnp.concatenate([w_dt_fold, w_b, w_c, pad], axis=2)   # (nl, 64, 128)

    # A = -exp(A_log), packed host-side into the (8,128) lane-dense state layout:
    # a_packed[p, q] = A[(q//64)*8 + p, q % 64]
    a_neg = -jnp.exp(jnp.transpose(params["a_log"], (0, 2, 1)))    # (nl, 16, 64)
    a_neg_packed = (a_neg.reshape(n_layer, 2, PACK_S, D_INNER)
                    .transpose(0, 2, 1, 3).reshape(n_layer, PACK_S, PACK_D))

    # MXU weights in bf16 (f32 accumulation in-kernel); elementwise params stay f32.
    w_in = params["w_in"].astype(MM_DTYPE)
    w_proj = w_proj.astype(MM_DTYPE)
    w_out = params["w_out"].astype(MM_DTYPE)

    # ---- generation-aware batch blocking: split only when a 2nd TensorCore exists ----
    num_tc = _num_tensorcores()
    nbb = 1
    if num_tc > 1 and B % num_tc == 0 and ((B // num_tc) * L) % 8 == 0:
        nbb = num_tc
        # Bound per-block activation temporaries (~xz, x_conv, delta, dtx, proj, y, ...)
        # so they fit comfortably in v7x's 64 MiB per-TC VMEM.
        def _per_block_bytes(n):
            return (B // n) * L * (4 * D_MODEL + 16 * D_INNER) * 4
        while (B % (nbb * 2) == 0 and ((B // (nbb * 2)) * L) % 8 == 0
               and _per_block_bytes(nbb) > (12 << 20)):
            nbb *= 2
    bb = B // nbb
    m = bb * L

    chunk = min(L, SCAN_CHUNK)

    # ---- explicit VMEM budget (block + scratch + temporaries, generous headroom) ----
    scan_bytes = 3 * chunk * bb * PACK_S * PACK_D * 4         # da_s / dbx_s / h_s
    ys_bytes = m * D_INNER * 4                                # y_s
    io_bytes = 3 * m * D_MODEL * 4                            # x double buffer + resident out
    tmp_bytes = 16 * m * D_INNER * 4                          # xz/x_conv/delta/dtx/proj/... temps
    est = scan_bytes + ys_bytes + io_bytes + tmp_bytes + (2 << 20)
    cap = max(min(int(_physical_vmem_bytes() * 0.75), 128 << 20), 32 << 20)
    vmem_limit = int(min(max(2 * est, 32 << 20), cap))

    operands = (x2d, params["norm_w"], w_in, params["w_conv"], params["b_conv"],
                w_proj, params["b_dt"], a_neg_packed, params["d"], w_out,
                params["norm_f_w"])

    kernel = functools.partial(fused_mamba_kernel, bb=bb, seq_len=L,
                               n_layer=n_layer, chunk=chunk)
    grid_spec = pltpu.PrefetchScalarGridSpec(
        num_scalar_prefetch=0,
        grid=(nbb, n_layer),   # layer axis last & "arbitrary" -> activation stays VMEM-resident
        in_specs=[pl.BlockSpec((m, D_MODEL), lambda i, l: (i, 0))]
                 + [_layer_spec(a) for a in operands[1:10]]
                 + [pl.BlockSpec((1, D_MODEL), lambda i, l: (0, 0))],
        out_specs=pl.BlockSpec((m, D_MODEL), lambda i, l: (i, 0)),
        scratch_shapes=[
            pltpu.VMEM((chunk, bb * PACK_S, PACK_D), jnp.float32),   # dA  (packed, chunked)
            pltpu.VMEM((chunk, bb * PACK_S, PACK_D), jnp.float32),   # dB*x
            pltpu.VMEM((chunk, bb * PACK_S, PACK_D), jnp.float32),   # h history (per chunk)
            pltpu.VMEM((m, D_INNER), jnp.float32),                   # y staging (whole block)
        ])
    hidden2d = pl.pallas_call(
        kernel,
        out_shape=jax.ShapeDtypeStruct((B * L, D_MODEL), jnp.float32),
        grid_spec=grid_spec,
        compiler_params=pltpu.CompilerParams(
            dimension_semantics=("parallel", "arbitrary"),
            vmem_limit_bytes=vmem_limit),
    )(*operands)

    hidden = hidden2d.reshape(B, L, D_MODEL)
    return hidden, 0   # matches MambaModel.forward: (mixer_model(input), 0)


# ----------------------------------------------------------------------------
# Parameter init (deterministic, synthetic), stacked on a leading n_layer axis.
# ----------------------------------------------------------------------------
def init_params(key, vocab_size, n_layer):
    ks = jax.random.split(key, 7)

    def _lin(k, fan_in, shape):
        return jax.random.normal(k, shape, jnp.float32) / jnp.sqrt(float(fan_in))

    # S4D-real init for A_log
    a = jnp.tile(jnp.arange(1, D_STATE + 1, dtype=jnp.float32)[None, None, :],
                 (n_layer, D_INNER, 1))
    return {
        "embedding": 0.02 * jax.random.normal(ks[0], (vocab_size, D_MODEL), jnp.float32),
        "norm_f_w": jnp.ones((1, D_MODEL), jnp.float32),
        "norm_w": jnp.ones((n_layer, 1, D_MODEL), jnp.float32),
        "w_in": _lin(ks[1], D_MODEL, (n_layer, D_MODEL, 2 * D_INNER)),     # in_proj.weight.T
        "w_conv": _lin(ks[2], D_CONV, (n_layer, D_CONV, D_INNER)),         # conv1d (tap, chan)
        "b_conv": jnp.zeros((n_layer, 1, D_INNER), jnp.float32),
        "w_x": _lin(ks[3], D_INNER, (n_layer, D_INNER, DT_RANK + 2 * D_STATE)),  # x_proj.weight.T
        "w_dt": _lin(ks[4], DT_RANK, (n_layer, DT_RANK, D_INNER)),         # dt_proj.weight.T
        "b_dt": jax.random.uniform(ks[5], (n_layer, 1, D_INNER), jnp.float32,
                                   minval=-4.6, maxval=-2.3),
        "a_log": jnp.log(a),                                               # (nl, D_INNER, D_STATE)
        "d": jnp.ones((n_layer, 1, D_INNER), jnp.float32),
        "w_out": _lin(ks[6], D_INNER, (n_layer, D_INNER, D_MODEL)),        # out_proj.weight.T
    }


if __name__ == "__main__":
    B, L = 2, 8
    VOCAB = 16
    N_LAYER = 2

    key = jax.random.PRNGKey(0)
    pkey, tkey = jax.random.split(key)
    params = init_params(pkey, VOCAB, N_LAYER)
    tokens = jax.random.randint(tkey, (B, L), 0, VOCAB, dtype=jnp.int32)

    hidden, aux = jax.jit(mamba_model_forward)(params, tokens)
    hidden = jax.block_until_ready(hidden)
    assert hidden.shape == (B, L, D_MODEL)
    assert bool(jnp.all(jnp.isfinite(hidden)))
    print("KERNEL_OK")
</pallas_src>

<mosaic_0001>
module attributes {stable_mosaic.version = 11 : i64} {
  func.func @fused_mamba_kernel(%arg0: i32, %arg1: i32, %arg2: memref<16x32xf32, #tpu.memory_space<vmem>>, %arg3: memref<1x1x32xf32, #tpu.memory_space<vmem>>, %arg4: memref<1x32x128xbf16, #tpu.memory_space<vmem>>, %arg5: memref<1x4x64xf32, #tpu.memory_space<vmem>>, %arg6: memref<1x1x64xf32, #tpu.memory_space<vmem>>, %arg7: memref<1x64x128xbf16, #tpu.memory_space<vmem>>, %arg8: memref<1x1x64xf32, #tpu.memory_space<vmem>>, %arg9: memref<1x8x128xf32, #tpu.memory_space<vmem>>, %arg10: memref<1x1x64xf32, #tpu.memory_space<vmem>>, %arg11: memref<1x64x32xbf16, #tpu.memory_space<vmem>>, %arg12: memref<1x32xf32, #tpu.memory_space<vmem>>, %arg13: memref<16x32xf32, #tpu.memory_space<vmem>>, %arg14: memref<8x16x128xf32, #tpu.memory_space<vmem>>, %arg15: memref<8x16x128xf32, #tpu.memory_space<vmem>>, %arg16: memref<8x16x128xf32, #tpu.memory_space<vmem>>, %arg17: memref<16x64xf32, #tpu.memory_space<vmem>>) attributes {dimension_semantics = [#tpu.dimension_semantics<parallel>, #tpu.dimension_semantics<arbitrary>], iteration_bounds = array<i64: 1, 2>, scalar_prefetch = 0 : i64, scratch_operands = 4 : i64, tpu.core_type = #tpu.core_type<tc>, window_params = [{transform_indices = @transform_0, window_bounds = array<i64: 16, 32>}, {transform_indices = @transform_1, window_bounds = array<i64: 1, 1, 32>}, {transform_indices = @transform_2, window_bounds = array<i64: 1, 32, 128>}, {transform_indices = @transform_3, window_bounds = array<i64: 1, 4, 64>}, {transform_indices = @transform_4, window_bounds = array<i64: 1, 1, 64>}, {transform_indices = @transform_5, window_bounds = array<i64: 1, 64, 128>}, {transform_indices = @transform_6, window_bounds = array<i64: 1, 1, 64>}, {transform_indices = @transform_7, window_bounds = array<i64: 1, 8, 128>}, {transform_indices = @transform_8, window_bounds = array<i64: 1, 1, 64>}, {transform_indices = @transform_9, window_bounds = array<i64: 1, 64, 32>}, {pipeline_mode = #tpu.pipeline_mode<synchronous>, transform_indices = @transform_10, window_bounds = array<i64: 1, 32>}, {transform_indices = @transform_11, window_bounds = array<i64: 16, 32>}]} {
    %c0_i32 = arith.constant 0 : i32
    %0 = arith.cmpi eq, %arg1, %c0_i32 : i32
    %1 = arith.extui %0 : i1 to i32
    %c0_i32_0 = arith.constant 0 : i32
    %2 = arith.cmpi ne, %1, %c0_i32_0 : i32
    scf.if %2 {
      %c0_136 = arith.constant 0 : index
      %c0_137 = arith.constant 0 : index
      %324 = vector.load %arg2[%c0_136, %c0_137] : memref<16x32xf32, #tpu.memory_space<vmem>>, vector<16x32xf32>
      %c0_138 = arith.constant 0 : index
      %c0_139 = arith.constant 0 : index
      %325 = vector.load %arg13[%c0_138, %c0_139] : memref<16x32xf32, #tpu.memory_space<vmem>>, vector<16x32xf32>
      tpu.vector_store %arg13[%c0_138, %c0_139], %324 {strides = array<i32>} : memref<16x32xf32, #tpu.memory_space<vmem>>, vector<16x32xf32>,
    } else {
    }
    %c0 = arith.constant 0 : index
    %c0_1 = arith.constant 0 : index
    %3 = vector.load %arg13[%c0, %c0_1] : memref<16x32xf32, #tpu.memory_space<vmem>>, vector<16x32xf32>
    %c0_2 = arith.constant 0 : index
    %c0_3 = arith.constant 0 : index
    %c0_4 = arith.constant 0 : index
    %4 = vector.load %arg3[%c0_2, %c0_3, %c0_4] : memref<1x1x32xf32, #tpu.memory_space<vmem>>, vector<1x1x32xf32>
    %5 = vector.shape_cast %4 : vector<1x1x32xf32> to vector<1x32xf32>
    %6 = arith.mulf %3, %3 : vector<16x32xf32>
    %cst = arith.constant dense<0.000000e+00> : vector<16xf32>
    %7 = vector.multi_reduction <add>, %6, %cst [1] : vector<16x32xf32> to vector<16xf32>
    %8 = vector.shape_cast %7 : vector<16xf32> to vector<16x1xf32>
    %cst_5 = arith.constant 3.200000e+01 : f32
    %9 = vector.broadcast %cst_5 : f32 to vector<16x1xf32>
    %10 = arith.divf %8, %9 : vector<16x1xf32>
    %cst_6 = arith.constant 9.99999974E-6 : f32
    %11 = vector.broadcast %cst_6 : f32 to vector<16x1xf32>
    %12 = arith.addf %10, %11 : vector<16x1xf32>
    %13 = math.rsqrt %12 : vector<16x1xf32>
    %14 = vector.broadcast %13 : vector<16x1xf32> to vector<16x32xf32>
    %15 = arith.mulf %3, %14 : vector<16x32xf32>
    %16 = vector.broadcast %5 : vector<1x32xf32> to vector<16x32xf32>
    %17 = arith.mulf %15, %16 : vector<16x32xf32>
    %18 = arith.truncf %17 : vector<16x32xf32> to vector<16x32xbf16>
    %c0_7 = arith.constant 0 : index
    %c0_8 = arith.constant 0 : index
    %c0_9 = arith.constant 0 : index
    %19 = vector.load %arg4[%c0_7, %c0_8, %c0_9] : memref<1x32x128xbf16, #tpu.memory_space<vmem>>, vector<1x32x128xbf16>
    %20 = vector.shape_cast %19 : vector<1x32x128xbf16> to vector<32x128xbf16>
    %cst_10 = arith.constant dense<0.000000e+00> : vector<16x128xf32>
    %21 = tpu.matmul %18, %20, %cst_10 {dimension_numbers = #tpu.dot_dimension_numbers<[1], [0], [0], [1], [0, 0, 1, 1], [], []>} : vector<16x32xbf16>, vector<32x128xbf16>, vector<16x128xf32> -> vector<16x128xf32>
    %22 = vector.extract_strided_slice %21 {offsets = [0, 0], sizes = [16, 64], strides = [1, 1]} : vector<16x128xf32> to vector<16x64xf32>
    %23 = vector.extract_strided_slice %21 {offsets = [0, 64], sizes = [16, 64], strides = [1, 1]} : vector<16x128xf32> to vector<16x64xf32>
    %c0_11 = arith.constant 0 : index
    %c0_12 = arith.constant 0 : index
    %c0_13 = arith.constant 0 : index
    %24 = vector.load %arg5[%c0_11, %c0_12, %c0_13] : memref<1x4x64xf32, #tpu.memory_space<vmem>>, vector<1x4x64xf32>
    %25 = vector.shape_cast %24 : vector<1x4x64xf32> to vector<4x64xf32>
    %cst_14 = arith.constant 0.000000e+00 : f32
    %26 = vector.broadcast %cst_14 : f32 to vector<3x64xf32>
    %27 = tpu.concatenate %26, %22 in 0 : vector<3x64xf32>, vector<16x64xf32> -> vector<19x64xf32>
    %28 = tpu.iota {dimensions = array<i32: 0>} : vector<16x64xi32>
    %c8_i32 = arith.constant 8 : i32
    %c0_i32_15 = arith.constant 0 : i32
    %29 = arith.cmpi eq, %c8_i32, %c0_i32_15 : i32
    %c1_i32 = arith.constant 1 : i32
    %30 = arith.select %29, %c1_i32, %c8_i32 : i32
    %31 = vector.broadcast %30 : i32 to vector<16x64xi32>
    %32 = arith.remsi %28, %31 : vector<16x64xi32>
    %c0_i32_16 = arith.constant 0 : i32
    %33 = vector.broadcast %c0_i32_16 : i32 to vector<16x64xi32>
    %34 = arith.cmpi ne, %32, %33 : vector<16x64xi32>
    %c0_i32_17 = arith.constant 0 : i32
    %35 = vector.broadcast %c0_i32_17 : i32 to vector<16x64xi32>
    %36 = arith.cmpi slt, %32, %35 : vector<16x64xi32>
    %c0_i32_18 = arith.constant 0 : i32
    %37 = arith.cmpi slt, %30, %c0_i32_18 : i32
    %38 = vector.broadcast %37 : i1 to vector<16x64xi1>
    %39 = vector.broadcast %38 : vector<16x64xi1> to vector<16x64xi1>
    %40 = arith.xori %36, %39 : vector<16x64xi1>
    %41 = arith.andi %40, %34 : vector<16x64xi1>
    %42 = vector.broadcast %30 : i32 to vector<16x64xi32>
    %43 = arith.addi %32, %42 : vector<16x64xi32>
    %44 = arith.select %41, %43, %32 : vector<16x64xi1>, vector<16x64xi32>
    %45 = vector.extract_strided_slice %25 {offsets = [3, 0], sizes = [1, 64], strides = [1, 1]} : vector<4x64xf32> to vector<1x64xf32>
    %46 = vector.broadcast %45 : vector<1x64xf32> to vector<16x64xf32>
    %47 = arith.mulf %22, %46 : vector<16x64xf32>
    %48 = vector.extract_strided_slice %27 {offsets = [2, 0], sizes = [16, 64], strides = [1, 1]} : vector<19x64xf32> to vector<16x64xf32>
    %c1_i32_19 = arith.constant 1 : i32
    %49 = vector.broadcast %c1_i32_19 : i32 to vector<16x64xi32>
    %50 = arith.cmpi sge, %44, %49 : vector<16x64xi32>
    %cst_20 = arith.constant 0.000000e+00 : f32
    %51 = vector.broadcast %cst_20 : f32 to vector<16x64xf32>
    %52 = arith.select %50, %48, %51 : vector<16x64xi1>, vector<16x64xf32>
    %53 = vector.extract_strided_slice %25 {offsets = [2, 0], sizes = [1, 64], strides = [1, 1]} : vector<4x64xf32> to vector<1x64xf32>
    %54 = vector.broadcast %53 : vector<1x64xf32> to vector<16x64xf32>
    %55 = arith.mulf %52, %54 : vector<16x64xf32>
    %56 = arith.addf %47, %55 : vector<16x64xf32>
    %57 = vector.extract_strided_slice %27 {offsets = [1, 0], sizes = [16, 64], strides = [1, 1]} : vector<19x64xf32> to vector<16x64xf32>
    %c2_i32 = arith.constant 2 : i32
    %58 = vector.broadcast %c2_i32 : i32 to vector<16x64xi32>
    %59 = arith.cmpi sge, %44, %58 : vector<16x64xi32>
    %cst_21 = arith.constant 0.000000e+00 : f32
    %60 = vector.broadcast %cst_21 : f32 to vector<16x64xf32>
    %61 = arith.select %59, %57, %60 : vector<16x64xi1>, vector<16x64xf32>
    %62 = vector.extract_strided_slice %25 {offsets = [1, 0], sizes = [1, 64], strides = [1, 1]} : vector<4x64xf32> to vector<1x64xf32>
    %63 = vector.broadcast %62 : vector<1x64xf32> to vector<16x64xf32>
    %64 = arith.mulf %61, %63 : vector<16x64xf32>
    %65 = arith.addf %56, %64 : vector<16x64xf32>
    %66 = vector.extract_strided_slice %27 {offsets = [0, 0], sizes = [16, 64], strides = [1, 1]} : vector<19x64xf32> to vector<16x64xf32>
    %c3_i32 = arith.constant 3 : i32
    %67 = vector.broadcast %c3_i32 : i32 to vector<16x64xi32>
    %68 = arith.cmpi sge, %44, %67 : vector<16x64xi32>
    %cst_22 = arith.constant 0.000000e+00 : f32
    %69 = vector.broadcast %cst_22 : f32 to vector<16x64xf32>
    %70 = arith.select %68, %66, %69 : vector<16x64xi1>, vector<16x64xf32>
    %71 = vector.extract_strided_slice %25 {offsets = [0, 0], sizes = [1, 64], strides = [1, 1]} : vector<4x64xf32> to vector<1x64xf32>
    %72 = vector.broadcast %71 : vector<1x64xf32> to vector<16x64xf32>
    %73 = arith.mulf %70, %72 : vector<16x64xf32>
    %74 = arith.addf %65, %73 : vector<16x64xf32>
    %c0_23 = arith.constant 0 : index
    %c0_24 = arith.constant 0 : index
    %c0_25 = arith.constant 0 : index
    %75 = vector.load %arg6[%c0_23, %c0_24, %c0_25] : memref<1x1x64xf32, #tpu.memory_space<vmem>>, vector<1x1x64xf32>
    %76 = vector.shape_cast %75 : vector<1x1x64xf32> to vector<1x64xf32>
    %77 = vector.broadcast %76 : vector<1x64xf32> to vector<16x64xf32>
    %78 = arith.addf %74, %77 : vector<16x64xf32>
    %79 = arith.negf %78 : vector<16x64xf32>
    %80 = math.exp %79 : vector<16x64xf32>
    %cst_26 = arith.constant 1.000000e+00 : f32
    %81 = vector.broadcast %cst_26 : f32 to vector<16x64xf32>
    %82 = arith.addf %81, %80 : vector<16x64xf32>
    %83 = arith.divf %81, %82 : vector<16x64xf32>
    %84 = arith.mulf %78, %83 : vector<16x64xf32>
    %85 = arith.truncf %84 : vector<16x64xf32> to vector<16x64xbf16>
    %c0_27 = arith.constant 0 : index
    %c0_28 = arith.constant 0 : index
    %c0_29 = arith.constant 0 : index
    %86 = vector.load %arg7[%c0_27, %c0_28, %c0_29] : memref<1x64x128xbf16, #tpu.memory_space<vmem>>, vector<1x64x128xbf16>
    %87 = vector.shape_cast %86 : vector<1x64x128xbf16> to vector<64x128xbf16>
    %cst_30 = arith.constant dense<0.000000e+00> : vector<16x128xf32>
    %88 = tpu.matmul %85, %87, %cst_30 {dimension_numbers = #tpu.dot_dimension_numbers<[1], [0], [0], [1], [0, 0, 1, 1], [], []>} : vector<16x64xbf16>, vector<64x128xbf16>, vector<16x128xf32> -> vector<16x128xf32>
    %89 = vector.extract_strided_slice %88 {offsets = [0, 0], sizes = [16, 64], strides = [1, 1]} : vector<16x128xf32> to vector<16x64xf32>
    %c0_31 = arith.constant 0 : index
    %c0_32 = arith.constant 0 : index
    %c0_33 = arith.constant 0 : index
    %90 = vector.load %arg8[%c0_31, %c0_32, %c0_33] : memref<1x1x64xf32, #tpu.memory_space<vmem>>, vector<1x1x64xf32>
    %91 = vector.shape_cast %90 : vector<1x1x64xf32> to vector<1x64xf32>
    %92 = vector.broadcast %91 : vector<1x64xf32> to vector<16x64xf32>
    %93 = arith.addf %89, %92 : vector<16x64xf32>
    %cst_34 = arith.constant 2.000000e+01 : f32
    %94 = vector.broadcast %cst_34 : f32 to vector<16x64xf32>
    %95 = arith.cmpf ogt, %93, %94 : vector<16x64xf32>
    %cst_35 = arith.constant 2.000000e+01 : f32
    %96 = vector.broadcast %cst_35 : f32 to vector<16x64xf32>
    %97 = arith.minimumf %93, %96 : vector<16x64xf32>
    %98 = math.exp %97 : vector<16x64xf32>
    %99 = math.log1p %98 : vector<16x64xf32>
    %100 = arith.select %95, %93, %99 : vector<16x64xi1>, vector<16x64xf32>
    %101 = vector.extract_strided_slice %88 {offsets = [0, 64], sizes = [16, 16], strides = [1, 1]} : vector<16x128xf32> to vector<16x16xf32>
    %102 = vector.extract_strided_slice %88 {offsets = [0, 80], sizes = [16, 16], strides = [1, 1]} : vector<16x128xf32> to vector<16x16xf32>
    %c0_36 = arith.constant 0 : index
    %c0_37 = arith.constant 0 : index
    %c0_38 = arith.constant 0 : index
    %103 = vector.load %arg9[%c0_36, %c0_37, %c0_38] : memref<1x8x128xf32, #tpu.memory_space<vmem>>, vector<1x8x128xf32>
    %104 = vector.shape_cast %103 : vector<1x8x128xf32> to vector<8x128xf32>
    %c0_39 = arith.constant 0 : index
    %c0_40 = arith.constant 0 : index
    %c0_41 = arith.constant 0 : index
    %105 = vector.load %arg10[%c0_39, %c0_40, %c0_41] : memref<1x1x64xf32, #tpu.memory_space<vmem>>, vector<1x1x64xf32>
    %106 = vector.shape_cast %105 : vector<1x1x64xf32> to vector<1x64xf32>
    %107 = arith.mulf %100, %84 : vector<16x64xf32>
    %cst_42 = arith.constant 0.000000e+00 : f32
    %108 = vector.broadcast %cst_42 : f32 to vector<16x128xf32>
    %109 = vector.extract_strided_slice %100 {offsets = [0, 0], sizes = [8, 64], strides = [1, 1]} : vector<16x64xf32> to vector<8x64xf32>
    %110 = vector.extract_strided_slice %107 {offsets = [0, 0], sizes = [8, 64], strides = [1, 1]} : vector<16x64xf32> to vector<8x64xf32>
    %111 = tpu.concatenate %109, %109 in 1 : vector<8x64xf32>, vector<8x64xf32> -> vector<8x128xf32>
    %112 = vector.shape_cast %111 : vector<8x128xf32> to vector<8x1x128xf32>
    %113 = vector.shape_cast %104 : vector<8x128xf32> to vector<1x8x128xf32>
    %114 = vector.broadcast %112 : vector<8x1x128xf32> to vector<8x8x128xf32>
    %115 = vector.broadcast %113 : vector<1x8x128xf32> to vector<8x8x128xf32>
    %116 = arith.mulf %114, %115 : vector<8x8x128xf32>
    %117 = math.exp %116 : vector<8x8x128xf32>
    %118 = vector.extract_strided_slice %101 {offsets = [0, 0], sizes = [8, 16], strides = [1, 1]} : vector<16x16xf32> to vector<8x16xf32>
    %119 = vector.extract_strided_slice %118 {offsets = [0, 0], sizes = [8, 8], strides = [1, 1]} : vector<8x16xf32> to vector<8x8xf32>
    %120 = vector.shape_cast %119 : vector<8x8xf32> to vector<8x8x1xf32>
    %121 = vector.shape_cast %110 : vector<8x64xf32> to vector<8x1x64xf32>
    %122 = vector.broadcast %120 : vector<8x8x1xf32> to vector<8x8x64xf32>
    %123 = vector.broadcast %121 : vector<8x1x64xf32> to vector<8x8x64xf32>
    %124 = arith.mulf %122, %123 : vector<8x8x64xf32>
    %125 = vector.extract_strided_slice %118 {offsets = [0, 8], sizes = [8, 8], strides = [1, 1]} : vector<8x16xf32> to vector<8x8xf32>
    %126 = vector.shape_cast %125 : vector<8x8xf32> to vector<8x8x1xf32>
    %127 = vector.shape_cast %110 : vector<8x64xf32> to vector<8x1x64xf32>
    %128 = vector.broadcast %126 : vector<8x8x1xf32> to vector<8x8x64xf32>
    %129 = vector.broadcast %127 : vector<8x1x64xf32> to vector<8x8x64xf32>
    %130 = arith.mulf %128, %129 : vector<8x8x64xf32>
    %131 = tpu.concatenate %124, %130 in 2 : vector<8x8x64xf32>, vector<8x8x64xf32> -> vector<8x8x128xf32>
    %c0_43 = arith.constant 0 : index
    %c0_44 = arith.constant 0 : index
    %c0_45 = arith.constant 0 : index
    %132 = vector.load %arg14[%c0_43, %c0_44, %c0_45] : memref<8x16x128xf32, #tpu.memory_space<vmem>>, vector<8x8x128xf32>
    tpu.vector_store %arg14[%c0_43, %c0_44, %c0_45], %117 {strides = array<i32>} : memref<8x16x128xf32, #tpu.memory_space<vmem>>, vector<8x8x128xf32>,
    %c0_46 = arith.constant 0 : index
    %c0_47 = arith.constant 0 : index
    %c0_48 = arith.constant 0 : index
    %133 = vector.load %arg15[%c0_46, %c0_47, %c0_48] : memref<8x16x128xf32, #tpu.memory_space<vmem>>, vector<8x8x128xf32>
    tpu.vector_store %arg15[%c0_46, %c0_47, %c0_48], %131 {strides = array<i32>} : memref<8x16x128xf32, #tpu.memory_space<vmem>>, vector<8x8x128xf32>,
    %134 = vector.extract_strided_slice %100 {offsets = [8, 0], sizes = [8, 64], strides = [1, 1]} : vector<16x64xf32> to vector<8x64xf32>
    %135 = vector.extract_strided_slice %107 {offsets = [8, 0], sizes = [8, 64], strides = [1, 1]} : vector<16x64xf32> to vector<8x64xf32>
    %136 = tpu.concatenate %134, %134 in 1 : vector<8x64xf32>, vector<8x64xf32> -> vector<8x128xf32>
    %137 = vector.shape_cast %136 : vector<8x128xf32> to vector<8x1x128xf32>
    %138 = vector.shape_cast %104 : vector<8x128xf32> to vector<1x8x128xf32>
    %139 = vector.broadcast %137 : vector<8x1x128xf32> to vector<8x8x128xf32>
    %140 = vector.broadcast %138 : vector<1x8x128xf32> to vector<8x8x128xf32>
    %141 = arith.mulf %139, %140 : vector<8x8x128xf32>
    %142 = math.exp %141 : vector<8x8x128xf32>
    %143 = vector.extract_strided_slice %101 {offsets = [8, 0], sizes = [8, 16], strides = [1, 1]} : vector<16x16xf32> to vector<8x16xf32>
    %144 = vector.extract_strided_slice %143 {offsets = [0, 0], sizes = [8, 8], strides = [1, 1]} : vector<8x16xf32> to vector<8x8xf32>
    %145 = vector.shape_cast %144 : vector<8x8xf32> to vector<8x8x1xf32>
    %146 = vector.shape_cast %135 : vector<8x64xf32> to vector<8x1x64xf32>
    %147 = vector.broadcast %145 : vector<8x8x1xf32> to vector<8x8x64xf32>
    %148 = vector.broadcast %146 : vector<8x1x64xf32> to vector<8x8x64xf32>
    %149 = arith.mulf %147, %148 : vector<8x8x64xf32>
    %150 = vector.extract_strided_slice %143 {offsets = [0, 8], sizes = [8, 8], strides = [1, 1]} : vector<8x16xf32> to vector<8x8xf32>
    %151 = vector.shape_cast %150 : vector<8x8xf32> to vector<8x8x1xf32>
    %152 = vector.shape_cast %135 : vector<8x64xf32> to vector<8x1x64xf32>
    %153 = vector.broadcast %151 : vector<8x8x1xf32> to vector<8x8x64xf32>
    %154 = vector.broadcast %152 : vector<8x1x64xf32> to vector<8x8x64xf32>
    %155 = arith.mulf %153, %154 : vector<8x8x64xf32>
    %156 = tpu.concatenate %149, %155 in 2 : vector<8x8x64xf32>, vector<8x8x64xf32> -> vector<8x8x128xf32>
    %c0_49 = arith.constant 0 : index
    %c8 = arith.constant 8 : index
    %c0_50 = arith.constant 0 : index
    %157 = vector.load %arg14[%c0_49, %c8, %c0_50] : memref<8x16x128xf32, #tpu.memory_space<vmem>>, vector<8x8x128xf32>
    tpu.vector_store %arg14[%c0_49, %c8, %c0_50], %142 {strides = array<i32>} : memref<8x16x128xf32, #tpu.memory_space<vmem>>, vector<8x8x128xf32>,
    %c0_51 = arith.constant 0 : index
    %c8_52 = arith.constant 8 : index
    %c0_53 = arith.constant 0 : index
    %158 = vector.load %arg15[%c0_51, %c8_52, %c0_53] : memref<8x16x128xf32, #tpu.memory_space<vmem>>, vector<8x8x128xf32>
    tpu.vector_store %arg15[%c0_51, %c8_52, %c0_53], %156 {strides = array<i32>} : memref<8x16x128xf32, #tpu.memory_space<vmem>>, vector<8x8x128xf32>,
    %c0_i32_54 = arith.constant 0 : i32
    %159 = arith.index_cast %c0_i32_54 : i32 to index
    %c0_55 = arith.constant 0 : index
    %c0_56 = arith.constant 0 : index
    %160 = vector.load %arg14[%159, %c0_55, %c0_56] : memref<8x16x128xf32, #tpu.memory_space<vmem>>, vector<1x16x128xf32>
    %161 = vector.shape_cast %160 : vector<1x16x128xf32> to vector<16x128xf32>
    %162 = arith.mulf %161, %108 : vector<16x128xf32>
    %163 = arith.index_cast %c0_i32_54 : i32 to index
    %c0_57 = arith.constant 0 : index
    %c0_58 = arith.constant 0 : index
    %164 = vector.load %arg15[%163, %c0_57, %c0_58] : memref<8x16x128xf32, #tpu.memory_space<vmem>>, vector<1x16x128xf32>
    %165 = vector.shape_cast %164 : vector<1x16x128xf32> to vector<16x128xf32>
    %166 = arith.addf %162, %165 : vector<16x128xf32>
    %167 = arith.index_cast %c0_i32_54 : i32 to index
    %c0_59 = arith.constant 0 : index
    %c0_60 = arith.constant 0 : index
    %168 = vector.load %arg16[%167, %c0_59, %c0_60] : memref<8x16x128xf32, #tpu.memory_space<vmem>>, vector<1x16x128xf32>
    %169 = vector.shape_cast %168 : vector<1x16x128xf32> to vector<16x128xf32>
    %170 = vector.shape_cast %166 : vector<16x128xf32> to vector<1x16x128xf32>
    tpu.vector_store %arg16[%167, %c0_59, %c0_60], %170 {strides = array<i32>} : memref<8x16x128xf32, #tpu.memory_space<vmem>>, vector<1x16x128xf32>,
    %c1_i32_61 = arith.constant 1 : i32
    %171 = arith.index_cast %c1_i32_61 : i32 to index
    %c0_62 = arith.constant 0 : index
    %c0_63 = arith.constant 0 : index
    %172 = vector.load %arg14[%171, %c0_62, %c0_63] : memref<8x16x128xf32, #tpu.memory_space<vmem>>, vector<1x16x128xf32>
    %173 = vector.shape_cast %172 : vector<1x16x128xf32> to vector<16x128xf32>
    %174 = arith.mulf %173, %166 : vector<16x128xf32>
    %175 = arith.index_cast %c1_i32_61 : i32 to index
    %c0_64 = arith.constant 0 : index
    %c0_65 = arith.constant 0 : index
    %176 = vector.load %arg15[%175, %c0_64, %c0_65] : memref<8x16x128xf32, #tpu.memory_space<vmem>>, vector<1x16x128xf32>
    %177 = vector.shape_cast %176 : vector<1x16x128xf32> to vector<16x128xf32>
    %178 = arith.addf %174, %177 : vector<16x128xf32>
    %179 = arith.index_cast %c1_i32_61 : i32 to index
    %c0_66 = arith.constant 0 : index
    %c0_67 = arith.constant 0 : index
    %180 = vector.load %arg16[%179, %c0_66, %c0_67] : memref<8x16x128xf32, #tpu.memory_space<vmem>>, vector<1x16x128xf32>
    %181 = vector.shape_cast %180 : vector<1x16x128xf32> to vector<16x128xf32>
    %182 = vector.shape_cast %178 : vector<16x128xf32> to vector<1x16x128xf32>
    tpu.vector_store %arg16[%179, %c0_66, %c0_67], %182 {strides = array<i32>} : memref<8x16x128xf32, #tpu.memory_space<vmem>>, vector<1x16x128xf32>,
    %c2_i32_68 = arith.constant 2 : i32
    %183 = arith.index_cast %c2_i32_68 : i32 to index
    %c0_69 = arith.constant 0 : index
    %c0_70 = arith.constant 0 : index
    %184 = vector.load %arg14[%183, %c0_69, %c0_70] : memref<8x16x128xf32, #tpu.memory_space<vmem>>, vector<1x16x128xf32>
    %185 = vector.shape_cast %184 : vector<1x16x128xf32> to vector<16x128xf32>
    %186 = arith.mulf %185, %178 : vector<16x128xf32>
    %187 = arith.index_cast %c2_i32_68 : i32 to index
    %c0_71 = arith.constant 0 : index
    %c0_72 = arith.constant 0 : index
    %188 = vector.load %arg15[%187, %c0_71, %c0_72] : memref<8x16x128xf32, #tpu.memory_space<vmem>>, vector<1x16x128xf32>
    %189 = vector.shape_cast %188 : vector<1x16x128xf32> to vector<16x128xf32>
    %190 = arith.addf %186, %189 : vector<16x128xf32>
    %191 = arith.index_cast %c2_i32_68 : i32 to index
    %c0_73 = arith.constant 0 : index
    %c0_74 = arith.constant 0 : index
    %192 = vector.load %arg16[%191, %c0_73, %c0_74] : memref<8x16x128xf32, #tpu.memory_space<vmem>>, vector<1x16x128xf32>
    %193 = vector.shape_cast %192 : vector<1x16x128xf32> to vector<16x128xf32>
    %194 = vector.shape_cast %190 : vector<16x128xf32> to vector<1x16x128xf32>
    tpu.vector_store %arg16[%191, %c0_73, %c0_74], %194 {strides = array<i32>} : memref<8x16x128xf32, #tpu.memory_space<vmem>>, vector<1x16x128xf32>,
    %c3_i32_75 = arith.constant 3 : i32
    %195 = arith.index_cast %c3_i32_75 : i32 to index
    %c0_76 = arith.constant 0 : index
    %c0_77 = arith.constant 0 : index
    %196 = vector.load %arg14[%195, %c0_76, %c0_77] : memref<8x16x128xf32, #tpu.memory_space<vmem>>, vector<1x16x128xf32>
    %197 = vector.shape_cast %196 : vector<1x16x128xf32> to vector<16x128xf32>
    %198 = arith.mulf %197, %190 : vector<16x128xf32>
    %199 = arith.index_cast %c3_i32_75 : i32 to index
    %c0_78 = arith.constant 0 : index
    %c0_79 = arith.constant 0 : index
    %200 = vector.load %arg15[%199, %c0_78, %c0_79] : memref<8x16x128xf32, #tpu.memory_space<vmem>>, vector<1x16x128xf32>
    %201 = vector.shape_cast %200 : vector<1x16x128xf32> to vector<16x128xf32>
    %202 = arith.addf %198, %201 : vector<16x128xf32>
    %203 = arith.index_cast %c3_i32_75 : i32 to index
    %c0_80 = arith.constant 0 : index
    %c0_81 = arith.constant 0 : index
    %204 = vector.load %arg16[%203, %c0_80, %c0_81] : memref<8x16x128xf32, #tpu.memory_space<vmem>>, vector<1x16x128xf32>
    %205 = vector.shape_cast %204 : vector<1x16x128xf32> to vector<16x128xf32>
    %206 = vector.shape_cast %202 : vector<16x128xf32> to vector<1x16x128xf32>
    tpu.vector_store %arg16[%203, %c0_80, %c0_81], %206 {strides = array<i32>} : memref<8x16x128xf32, #tpu.memory_space<vmem>>, vector<1x16x128xf32>,
    %c4_i32 = arith.constant 4 : i32
    %207 = arith.index_cast %c4_i32 : i32 to index
    %c0_82 = arith.constant 0 : index
    %c0_83 = arith.constant 0 : index
    %208 = vector.load %arg14[%207, %c0_82, %c0_83] : memref<8x16x128xf32, #tpu.memory_space<vmem>>, vector<1x16x128xf32>
    %209 = vector.shape_cast %208 : vector<1x16x128xf32> to vector<16x128xf32>
    %210 = arith.mulf %209, %202 : vector<16x128xf32>
    %211 = arith.index_cast %c4_i32 : i32 to index
    %c0_84 = arith.constant 0 : index
    %c0_85 = arith.constant 0 : index
    %212 = vector.load %arg15[%211, %c0_84, %c0_85] : memref<8x16x128xf32, #tpu.memory_space<vmem>>, vector<1x16x128xf32>
    %213 = vector.shape_cast %212 : vector<1x16x128xf32> to vector<16x128xf32>
    %214 = arith.addf %210, %213 : vector<16x128xf32>
    %215 = arith.index_cast %c4_i32 : i32 to index
    %c0_86 = arith.constant 0 : index
    %c0_87 = arith.constant 0 : index
    %216 = vector.load %arg16[%215, %c0_86, %c0_87] : memref<8x16x128xf32, #tpu.memory_space<vmem>>, vector<1x16x128xf32>
    %217 = vector.shape_cast %216 : vector<1x16x128xf32> to vector<16x128xf32>
    %218 = vector.shape_cast %214 : vector<16x128xf32> to vector<1x16x128xf32>
    tpu.vector_store %arg16[%215, %c0_86, %c0_87], %218 {strides = array<i32>} : memref<8x16x128xf32, #tpu.memory_space<vmem>>, vector<1x16x128xf32>,
    %c5_i32 = arith.constant 5 : i32
    %219 = arith.index_cast %c5_i32 : i32 to index
    %c0_88 = arith.constant 0 : index
    %c0_89 = arith.constant 0 : index
    %220 = vector.load %arg14[%219, %c0_88, %c0_89] : memref<8x16x128xf32, #tpu.memory_space<vmem>>, vector<1x16x128xf32>
    %221 = vector.shape_cast %220 : vector<1x16x128xf32> to vector<16x128xf32>
    %222 = arith.mulf %221, %214 : vector<16x128xf32>
    %223 = arith.index_cast %c5_i32 : i32 to index
    %c0_90 = arith.constant 0 : index
    %c0_91 = arith.constant 0 : index
    %224 = vector.load %arg15[%223, %c0_90, %c0_91] : memref<8x16x128xf32, #tpu.memory_space<vmem>>, vector<1x16x128xf32>
    %225 = vector.shape_cast %224 : vector<1x16x128xf32> to vector<16x128xf32>
    %226 = arith.addf %222, %225 : vector<16x128xf32>
    %227 = arith.index_cast %c5_i32 : i32 to index
    %c0_92 = arith.constant 0 : index
    %c0_93 = arith.constant 0 : index
    %228 = vector.load %arg16[%227, %c0_92, %c0_93] : memref<8x16x128xf32, #tpu.memory_space<vmem>>, vector<1x16x128xf32>
    %229 = vector.shape_cast %228 : vector<1x16x128xf32> to vector<16x128xf32>
    %230 = vector.shape_cast %226 : vector<16x128xf32> to vector<1x16x128xf32>
    tpu.vector_store %arg16[%227, %c0_92, %c0_93], %230 {strides = array<i32>} : memref<8x16x128xf32, #tpu.memory_space<vmem>>, vector<1x16x128xf32>,
    %c6_i32 = arith.constant 6 : i32
    %231 = arith.index_cast %c6_i32 : i32 to index
    %c0_94 = arith.constant 0 : index
    %c0_95 = arith.constant 0 : index
    %232 = vector.load %arg14[%231, %c0_94, %c0_95] : memref<8x16x128xf32, #tpu.memory_space<vmem>>, vector<1x16x128xf32>
    %233 = vector.shape_cast %232 : vector<1x16x128xf32> to vector<16x128xf32>
    %234 = arith.mulf %233, %226 : vector<16x128xf32>
    %235 = arith.index_cast %c6_i32 : i32 to index
    %c0_96 = arith.constant 0 : index
    %c0_97 = arith.constant 0 : index
    %236 = vector.load %arg15[%235, %c0_96, %c0_97] : memref<8x16x128xf32, #tpu.memory_space<vmem>>, vector<1x16x128xf32>
    %237 = vector.shape_cast %236 : vector<1x16x128xf32> to vector<16x128xf32>
    %238 = arith.addf %234, %237 : vector<16x128xf32>
    %239 = arith.index_cast %c6_i32 : i32 to index
    %c0_98 = arith.constant 0 : index
    %c0_99 = arith.constant 0 : index
    %240 = vector.load %arg16[%239, %c0_98, %c0_99] : memref<8x16x128xf32, #tpu.memory_space<vmem>>, vector<1x16x128xf32>
    %241 = vector.shape_cast %240 : vector<1x16x128xf32> to vector<16x128xf32>
    %242 = vector.shape_cast %238 : vector<16x128xf32> to vector<1x16x128xf32>
    tpu.vector_store %arg16[%239, %c0_98, %c0_99], %242 {strides = array<i32>} : memref<8x16x128xf32, #tpu.memory_space<vmem>>, vector<1x16x128xf32>,
    %c7_i32 = arith.constant 7 : i32
    %243 = arith.index_cast %c7_i32 : i32 to index
    %c0_100 = arith.constant 0 : index
    %c0_101 = arith.constant 0 : index
    %244 = vector.load %arg14[%243, %c0_100, %c0_101] : memref<8x16x128xf32, #tpu.memory_space<vmem>>, vector<1x16x128xf32>
    %245 = vector.shape_cast %244 : vector<1x16x128xf32> to vector<16x128xf32>
    %246 = arith.mulf %245, %238 : vector<16x128xf32>
    %247 = arith.index_cast %c7_i32 : i32 to index
    %c0_102 = arith.constant 0 : index
    %c0_103 = arith.constant 0 : index
    %248 = vector.load %arg15[%247, %c0_102, %c0_103] : memref<8x16x128xf32, #tpu.memory_space<vmem>>, vector<1x16x128xf32>
    %249 = vector.shape_cast %248 : vector<1x16x128xf32> to vector<16x128xf32>
    %250 = arith.addf %246, %249 : vector<16x128xf32>
    %251 = arith.index_cast %c7_i32 : i32 to index
    %c0_104 = arith.constant 0 : index
    %c0_105 = arith.constant 0 : index
    %252 = vector.load %arg16[%251, %c0_104, %c0_105] : memref<8x16x128xf32, #tpu.memory_space<vmem>>, vector<1x16x128xf32>
    %253 = vector.shape_cast %252 : vector<1x16x128xf32> to vector<16x128xf32>
    %254 = vector.shape_cast %250 : vector<16x128xf32> to vector<1x16x128xf32>
    tpu.vector_store %arg16[%251, %c0_104, %c0_105], %254 {strides = array<i32>} : memref<8x16x128xf32, #tpu.memory_space<vmem>>, vector<1x16x128xf32>,
    %c8_i32_106 = arith.constant 8 : i32
    %c0_107 = arith.constant 0 : index
    %c0_108 = arith.constant 0 : index
    %c0_109 = arith.constant 0 : index
    %255 = vector.load %arg16[%c0_107, %c0_108, %c0_109] : memref<8x16x128xf32, #tpu.memory_space<vmem>>, vector<8x8x128xf32>
    %256 = vector.extract_strided_slice %102 {offsets = [0, 0], sizes = [8, 16], strides = [1, 1]} : vector<16x16xf32> to vector<8x16xf32>
    %257 = vector.extract_strided_slice %255 {offsets = [0, 0, 0], sizes = [8, 8, 64], strides = [1, 1, 1]} : vector<8x8x128xf32> to vector<8x8x64xf32>
    %258 = vector.extract_strided_slice %256 {offsets = [0, 0], sizes = [8, 8], strides = [1, 1]} : vector<8x16xf32> to vector<8x8xf32>
    %259 = vector.shape_cast %258 : vector<8x8xf32> to vector<8x8x1xf32>
    %260 = vector.broadcast %259 : vector<8x8x1xf32> to vector<8x8x64xf32>
    %261 = arith.mulf %257, %260 : vector<8x8x64xf32>
    %cst_110 = arith.constant dense<0.000000e+00> : vector<8x64xf32>
    %262 = vector.multi_reduction <add>, %261, %cst_110 [1] : vector<8x8x64xf32> to vector<8x64xf32>
    %263 = vector.extract_strided_slice %255 {offsets = [0, 0, 64], sizes = [8, 8, 64], strides = [1, 1, 1]} : vector<8x8x128xf32> to vector<8x8x64xf32>
    %264 = vector.extract_strided_slice %256 {offsets = [0, 8], sizes = [8, 8], strides = [1, 1]} : vector<8x16xf32> to vector<8x8xf32>
    %265 = vector.shape_cast %264 : vector<8x8xf32> to vector<8x8x1xf32>
    %266 = vector.broadcast %265 : vector<8x8x1xf32> to vector<8x8x64xf32>
    %267 = arith.mulf %263, %266 : vector<8x8x64xf32>
    %cst_111 = arith.constant dense<0.000000e+00> : vector<8x64xf32>
    %268 = vector.multi_reduction <add>, %267, %cst_111 [1] : vector<8x8x64xf32> to vector<8x64xf32>
    %269 = arith.addf %262, %268 : vector<8x64xf32>
    %270 = vector.extract_strided_slice %84 {offsets = [0, 0], sizes = [8, 64], strides = [1, 1]} : vector<16x64xf32> to vector<8x64xf32>
    %271 = vector.broadcast %106 : vector<1x64xf32> to vector<8x64xf32>
    %272 = arith.mulf %271, %270 : vector<8x64xf32>
    %273 = arith.addf %269, %272 : vector<8x64xf32>
    %c0_112 = arith.constant 0 : index
    %c0_113 = arith.constant 0 : index
    %274 = vector.load %arg17[%c0_112, %c0_113] : memref<16x64xf32, #tpu.memory_space<vmem>>, vector<8x64xf32>
    tpu.vector_store %arg17[%c0_112, %c0_113], %273 {strides = array<i32>} : memref<16x64xf32, #tpu.memory_space<vmem>>, vector<8x64xf32>,
    %c0_114 = arith.constant 0 : index
    %c8_115 = arith.constant 8 : index
    %c0_116 = arith.constant 0 : index
    %275 = vector.load %arg16[%c0_114, %c8_115, %c0_116] : memref<8x16x128xf32, #tpu.memory_space<vmem>>, vector<8x8x128xf32>
    %276 = vector.extract_strided_slice %102 {offsets = [8, 0], sizes = [8, 16], strides = [1, 1]} : vector<16x16xf32> to vector<8x16xf32>
    %277 = vector.extract_strided_slice %275 {offsets = [0, 0, 0], sizes = [8, 8, 64], strides = [1, 1, 1]} : vector<8x8x128xf32> to vector<8x8x64xf32>
    %278 = vector.extract_strided_slice %276 {offsets = [0, 0], sizes = [8, 8], strides = [1, 1]} : vector<8x16xf32> to vector<8x8xf32>
    %279 = vector.shape_cast %278 : vector<8x8xf32> to vector<8x8x1xf32>
    %280 = vector.broadcast %279 : vector<8x8x1xf32> to vector<8x8x64xf32>
    %281 = arith.mulf %277, %280 : vector<8x8x64xf32>
    %cst_117 = arith.constant dense<0.000000e+00> : vector<8x64xf32>
    %282 = vector.multi_reduction <add>, %281, %cst_117 [1] : vector<8x8x64xf32> to vector<8x64xf32>
    %283 = vector.extract_strided_slice %275 {offsets = [0, 0, 64], sizes = [8, 8, 64], strides = [1, 1, 1]} : vector<8x8x128xf32> to vector<8x8x64xf32>
    %284 = vector.extract_strided_slice %276 {offsets = [0, 8], sizes = [8, 8], strides = [1, 1]} : vector<8x16xf32> to vector<8x8xf32>
    %285 = vector.shape_cast %284 : vector<8x8xf32> to vector<8x8x1xf32>
    %286 = vector.broadcast %285 : vector<8x8x1xf32> to vector<8x8x64xf32>
    %287 = arith.mulf %283, %286 : vector<8x8x64xf32>
    %cst_118 = arith.constant dense<0.000000e+00> : vector<8x64xf32>
    %288 = vector.multi_reduction <add>, %287, %cst_118 [1] : vector<8x8x64xf32> to vector<8x64xf32>
    %289 = arith.addf %282, %288 : vector<8x64xf32>
    %290 = vector.extract_strided_slice %84 {offsets = [8, 0], sizes = [8, 64], strides = [1, 1]} : vector<16x64xf32> to vector<8x64xf32>
    %291 = vector.broadcast %106 : vector<1x64xf32> to vector<8x64xf32>
    %292 = arith.mulf %291, %290 : vector<8x64xf32>
    %293 = arith.addf %289, %292 : vector<8x64xf32>
    %c8_119 = arith.constant 8 : index
    %c0_120 = arith.constant 0 : index
    %294 = vector.load %arg17[%c8_119, %c0_120] : memref<16x64xf32, #tpu.memory_space<vmem>>, vector<8x64xf32>
    tpu.vector_store %arg17[%c8_119, %c0_120], %293 {strides = array<i32>} : memref<16x64xf32, #tpu.memory_space<vmem>>, vector<8x64xf32>,
    %c0_121 = arith.constant 0 : index
    %c0_122 = arith.constant 0 : index
    %295 = vector.load %arg17[%c0_121, %c0_122] : memref<16x64xf32, #tpu.memory_space<vmem>>, vector<16x64xf32>
    %296 = arith.negf %23 : vector<16x64xf32>
    %297 = math.exp %296 : vector<16x64xf32>
    %cst_123 = arith.constant 1.000000e+00 : f32
    %298 = vector.broadcast %cst_123 : f32 to vector<16x64xf32>
    %299 = arith.addf %298, %297 : vector<16x64xf32>
    %300 = arith.divf %298, %299 : vector<16x64xf32>
    %301 = arith.mulf %23, %300 : vector<16x64xf32>
    %302 = arith.mulf %295, %301 : vector<16x64xf32>
    %303 = arith.truncf %302 : vector<16x64xf32> to vector<16x64xbf16>
    %c0_124 = arith.constant 0 : index
    %c0_125 = arith.constant 0 : index
    %c0_126 = arith.constant 0 : index
    %304 = vector.load %arg11[%c0_124, %c0_125, %c0_126] : memref<1x64x32xbf16, #tpu.memory_space<vmem>>, vector<1x64x32xbf16>
    %305 = vector.shape_cast %304 : vector<1x64x32xbf16> to vector<64x32xbf16>
    %cst_127 = arith.constant dense<0.000000e+00> : vector<16x32xf32>
    %306 = tpu.matmul %303, %305, %cst_127 {dimension_numbers = #tpu.dot_dimension_numbers<[1], [0], [0], [1], [0, 0, 1, 1], [], []>} : vector<16x64xbf16>, vector<64x32xbf16>, vector<16x32xf32> -> vector<16x32xf32>
    %307 = arith.addf %3, %306 : vector<16x32xf32>
    %c1_i32_128 = arith.constant 1 : i32
    %308 = arith.cmpi eq, %arg1, %c1_i32_128 : i32
    %c0_129 = arith.constant 0 : index
    %c0_130 = arith.constant 0 : index
    %309 = vector.load %arg12[%c0_129, %c0_130] : memref<1x32xf32, #tpu.memory_space<vmem>>, vector<1x32xf32>
    %310 = arith.mulf %307, %307 : vector<16x32xf32>
    %cst_131 = arith.constant dense<0.000000e+00> : vector<16xf32>
    %311 = vector.multi_reduction <add>, %310, %cst_131 [1] : vector<16x32xf32> to vector<16xf32>
    %312 = vector.shape_cast %311 : vector<16xf32> to vector<16x1xf32>
    %cst_132 = arith.constant 3.200000e+01 : f32
    %313 = vector.broadcast %cst_132 : f32 to vector<16x1xf32>
    %314 = arith.divf %312, %313 : vector<16x1xf32>
    %cst_133 = arith.constant 9.99999974E-6 : f32
    %315 = vector.broadcast %cst_133 : f32 to vector<16x1xf32>
    %316 = arith.addf %314, %315 : vector<16x1xf32>
    %317 = math.rsqrt %316 : vector<16x1xf32>
    %318 = vector.broadcast %317 : vector<16x1xf32> to vector<16x32xf32>
    %319 = arith.mulf %307, %318 : vector<16x32xf32>
    %320 = vector.broadcast %309 : vector<1x32xf32> to vector<16x32xf32>
    %321 = arith.mulf %319, %320 : vector<16x32xf32>
    %322 = arith.select %308, %321, %307 : vector<16x32xf32>
    %c0_134 = arith.constant 0 : index
    %c0_135 = arith.constant 0 : index
    %323 = vector.load %arg13[%c0_134, %c0_135] : memref<16x32xf32, #tpu.memory_space<vmem>>, vector<16x32xf32>
    tpu.vector_store %arg13[%c0_134, %c0_135], %322 {strides = array<i32>} : memref<16x32xf32, #tpu.memory_space<vmem>>, vector<16x32xf32>,
    return
  }
  func.func @transform_0(%arg0: i32, %arg1: i32) -> (i32, i32) {
    %c0_i32 = arith.constant 0 : i32
    %c0_i32_0 = arith.constant 0 : i32
    return %arg0, %c0_i32 : i32, i32
  }
  func.func @transform_1(%arg0: i32, %arg1: i32) -> (i32, i32, i32) {
    %c0_i32 = arith.constant 0 : i32
    %c0_i32_0 = arith.constant 0 : i32
    %c0_i32_1 = arith.constant 0 : i32
    return %arg1, %c0_i32, %c0_i32_0 : i32, i32, i32
  }
  func.func @transform_2(%arg0: i32, %arg1: i32) -> (i32, i32, i32) {
    %c0_i32 = arith.constant 0 : i32
    %c0_i32_0 = arith.constant 0 : i32
    %c0_i32_1 = arith.constant 0 : i32
    return %arg1, %c0_i32, %c0_i32_0 : i32, i32, i32
  }
  func.func @transform_3(%arg0: i32, %arg1: i32) -> (i32, i32, i32) {
    %c0_i32 = arith.constant 0 : i32
    %c0_i32_0 = arith.constant 0 : i32
    %c0_i32_1 = arith.constant 0 : i32
    return %arg1, %c0_i32, %c0_i32_0 : i32, i32, i32
  }
  func.func @transform_4(%arg0: i32, %arg1: i32) -> (i32, i32, i32) {
    %c0_i32 = arith.constant 0 : i32
    %c0_i32_0 = arith.constant 0 : i32
    %c0_i32_1 = arith.constant 0 : i32
    return %arg1, %c0_i32, %c0_i32_0 : i32, i32, i32
  }
  func.func @transform_5(%arg0: i32, %arg1: i32) -> (i32, i32, i32) {
    %c0_i32 = arith.constant 0 : i32
    %c0_i32_0 = arith.constant 0 : i32
    %c0_i32_1 = arith.constant 0 : i32
    return %arg1, %c0_i32, %c0_i32_0 : i32, i32, i32
  }
  func.func @transform_6(%arg0: i32, %arg1: i32) -> (i32, i32, i32) {
    %c0_i32 = arith.constant 0 : i32
    %c0_i32_0 = arith.constant 0 : i32
    %c0_i32_1 = arith.constant 0 : i32
    return %arg1, %c0_i32, %c0_i32_0 : i32, i32, i32
  }
  func.func @transform_7(%arg0: i32, %arg1: i32) -> (i32, i32, i32) {
    %c0_i32 = arith.constant 0 : i32
    %c0_i32_0 = arith.constant 0 : i32
    %c0_i32_1 = arith.constant 0 : i32
    return %arg1, %c0_i32, %c0_i32_0 : i32, i32, i32
  }
  func.func @transform_8(%arg0: i32, %arg1: i32) -> (i32, i32, i32) {
    %c0_i32 = arith.constant 0 : i32
    %c0_i32_0 = arith.constant 0 : i32
    %c0_i32_1 = arith.constant 0 : i32
    return %arg1, %c0_i32, %c0_i32_0 : i32, i32, i32
  }
  func.func @transform_9(%arg0: i32, %arg1: i32) -> (i32, i32, i32) {
    %c0_i32 = arith.constant 0 : i32
    %c0_i32_0 = arith.constant 0 : i32
    %c0_i32_1 = arith.constant 0 : i32
    return %arg1, %c0_i32, %c0_i32_0 : i32, i32, i32
  }
  func.func @transform_10(%arg0: i32, %arg1: i32) -> (i32, i32) {
    %c0_i32 = arith.constant 0 : i32
    %c0_i32_0 = arith.constant 0 : i32
    %c0_i32_1 = arith.constant 0 : i32
    return %c0_i32, %c0_i32_0 : i32, i32
  }
  func.func @transform_11(%arg0: i32, %arg1: i32) -> (i32, i32) {
    %c0_i32 = arith.constant 0 : i32
    %c0_i32_0 = arith.constant 0 : i32
    return %arg0, %c0_i32 : i32, i32
  }
}

</mosaic_0001>

<llo_original>
// kernel: mamba_model_forward.1
$region0: #{mamba_model_forward.1}
  #allocation0 [shape = 'u32[]', space=smem, size = 0x4, offset = 0x4, fixed_abs, tag = 'smem constant byte address 0x4 - core index']
  #allocation1 [shape = 'u32[72,128]{1,0:T(1,128)}', space=vmem, size = 0x9000, scoped, tag = 'internal scratch']
  #allocation2 [shape = 'f32[8,16,128]{2,1,0:T(8,128)}', space=vmem, size = 0x10000, scoped, tag = 'scratch operand']
  #allocation3 [shape = 'f32[8,16,128]{2,1,0:T(8,128)}', space=vmem, size = 0x10000, scoped, tag = 'scratch operand']
  #allocation4 [shape = 'f32[8,16,128]{2,1,0:T(8,128)}', space=vmem, size = 0x10000, scoped, tag = 'scratch operand']
  #allocation5 [shape = 'f32[16,64]{1,0:T(8,128)}', space=vmem, size = 0x2000, scoped, tag = 'scratch operand']
  %s0 = inlined_call_operand.vmem [shape: f32[16,32], index: 0, kind: input, shape index: {}]
  %s1 = inlined_call_operand.vmem [shape: f32[2,1,32], index: 1, kind: input, shape index: {}]
  %s2 = inlined_call_operand.vmem [shape: bf16[2,32,128], index: 2, kind: input, shape index: {}]
  %s3 = inlined_call_operand.vmem [shape: f32[2,4,64], index: 3, kind: input, shape index: {}]
  %s4 = inlined_call_operand.vmem [shape: f32[2,1,64], index: 4, kind: input, shape index: {}]
  %s5 = inlined_call_operand.vmem [shape: bf16[2,64,128], index: 5, kind: input, shape index: {}]
  %s6 = inlined_call_operand.vmem [shape: f32[2,1,64], index: 6, kind: input, shape index: {}]
  %s7 = inlined_call_operand.vmem [shape: f32[2,8,128], index: 7, kind: input, shape index: {}]
  %s8 = inlined_call_operand.vmem [shape: f32[2,1,64], index: 8, kind: input, shape index: {}]
  %s9 = inlined_call_operand.vmem [shape: bf16[2,64,32], index: 9, kind: input, shape index: {}]
  %s10 = inlined_call_operand.vmem [shape: f32[1,32], index: 10, kind: input, shape index: {}]
  %s11 = inlined_call_operand.hbm [shape: f32[16,32], index: 11, kind: output, shape index: {}]
  %s12 = sld [smem:[#allocation0]]
  $region81: #{mamba_model_forward.1} parent=0
    _
  %s14 = ssub.s32 1, %s12
  %s15 = scalar_select 0, %s14, %s12
  $region1: #{mamba_model_forward.1} parent=0
    #allocation6 [shape = 'u8[8192]{0}', space=vmem, size = 0x2000, scoped, tag = 'output window, operand 0, single buffered']
    #allocation7 [shape = 's32[2]{0}', space=sflag, size = 0x8, scoped, tag = 'scoped memory for mamba_model_forward.1']
    %16 = vsyncpa [#allocation7], 0
    loop: start=0, step=1, limit=4
    $region2: #{mamba_model_forward.1} parent=1 // loop_pre_header
      _
    $region3: #{mamba_model_forward.1} parent=1 // loop_header
      %s18 = sphi 0, %s22
      %p19 = scmp.ge.s32.totalorder %s18, 4
      %s25 = sphi 0, %s37
      %s26 = sphi 0, %s33
      %s27 = sphi 0, %s25
      %s28 = sphi 0, %s26
      %s29 = sphi 0, %s27
      %s30 = sphi 0, %s28
      %s40 = sphi 0, %s42
      %s43 = sphi 0, %s40
      %s44 = sphi 0, %s43
      %s60 = sphi 0, %s44
      %s66 = sphi 0, %s68
      %s69 = sphi 0, %s66
      %s70 = sphi 0, %s69
      %s86 = sphi 0, %s70
      %s92 = sphi 0, %s94
      %s95 = sphi 0, %s92
      %s96 = sphi 0, %s95
      %s112 = sphi 0, %s96
      %s118 = sphi 0, %s120
      %s121 = sphi 0, %s118
      %s122 = sphi 0, %s121
      %s138 = sphi 0, %s122
      %s144 = sphi 0, %s146
      %s147 = sphi 0, %s144
      %s148 = sphi 0, %s147
      %s164 = sphi 0, %s148
      %s170 = sphi 0, %s172
      %s173 = sphi 0, %s170
      %s174 = sphi 0, %s173
      %s190 = sphi 0, %s174
      %s196 = sphi 0, %s198
      %s199 = sphi 0, %s196
      %s200 = sphi 0, %s199
      %s216 = sphi 0, %s200
      %s222 = sphi 0, %s224
      %s225 = sphi 0, %s222
      %s226 = sphi 0, %s225
      %s242 = sphi 0, %s226
      %s248 = sphi 0, %s250
      %s251 = sphi 0, %s248
      %s252 = sphi 0, %s251
      %s268 = sphi 0, %s252
      %s274 = sphi 0, %s276
      %s277 = sphi 0, %s274
      %s278 = sphi 0, %s277
      %s294 = sphi 0, %s278
      %s298 = sphi 0, %s298
      %s300 = sphi 0, %s298
      %s301 = sphi 0, %s300
      %s315 = sphi 0, %s301
      %s321 = sphi 0, %s323
      %s324 = sphi 0, %s321
      %s325 = sphi 0, %s324
      %s341 = sphi 0, %s325
    $region4: #{mamba_model_forward.1} parent=1 // loop_header_branch
      %21 = sbr.rel (%p19) target = $region8
    $region5: #{mamba_model_forward.1} parent=1 // loop_body
      %s23 = ssub.s32 %s18, 1
      %s24 = ssub.s32 %s18, 2
      %s31 = sadd.s32 1, %s26
      %p32 = scmp.ge.s32.totalorder %s31, 2
      %s33 = scalar_select %p32, 0, %s31
      %s34 = sadd.s32 1, %s25
      %s35 = scalar_select %p32, %s34, %s25
      %p36 = scmp.ge.s32.totalorder %s35, 1
      %s37 = scalar_select %p36, 0, %s35
      %s38 = ssub.s32 %s25, %s37
      %p39 = scmp.eq.s32.totalorder %s38, 0
      %s41 = sadd.s32 %s40, 1
      %s42 = scalar_select %p39, %s40, %s41
      %p45 = pneg %p39
      %p46 = scmp.eq.s32.totalorder %s18, 1
      %p47 = por %p45, %p46
      %p48 = scmp.ne.s32.totalorder %s40, %s43
      %p49 = scmp.eq.s32.totalorder %s18, 0
      %p50 = por %p48, %p49
      %p51 = scmp.ne.s32.totalorder %s40, %s43
      %p52 = scmp.eq.s32.totalorder %s23, 1
      %p53 = por %p51, %p52
      %p54 = scmp.ne.s32.totalorder %s43, %s44
      %p55 = scmp.eq.s32.totalorder %s23, 0
      %p56 = por %p54, %p55
      %p57 = scmp.ne.s32.totalorder %s43, %s44
      %p58 = scmp.eq.s32.totalorder %s24, 1
      %p59 = por %p57, %p58
      %p61 = scmp.ne.s32.totalorder %s44, %s60
      %p62 = scmp.eq.s32.totalorder %s24, 0
      %p63 = por %p61, %p62
      %s64 = ssub.s32 %s26, %s33
      %p65 = scmp.eq.s32.totalorder %s64, 0
      %s67 = sadd.s32 %s66, 1
      %s68 = scalar_select %p65, %s66, %s67
      %p71 = pneg %p65
      %p72 = scmp.eq.s32.totalorder %s18, 1
      %p73 = por %p71, %p72
      %p74 = scmp.ne.s32.totalorder %s66, %s69
      %p75 = scmp.eq.s32.totalorder %s18, 0
      %p76 = por %p74, %p75
      %p77 = scmp.ne.s32.totalorder %s66, %s69
      %p78 = scmp.eq.s32.totalorder %s23, 1
      %p79 = por %p77, %p78
      %p80 = scmp.ne.s32.totalorder %s69, %s70
      %p81 = scmp.eq.s32.totalorder %s23, 0
      %p82 = por %p80, %p81
      %p83 = scmp.ne.s32.totalorder %s69, %s70
      %p84 = scmp.eq.s32.totalorder %s24, 1
      %p85 = por %p83, %p84
      %p87 = scmp.ne.s32.totalorder %s70, %s86
      %p88 = scmp.eq.s32.totalorder %s24, 0
      %p89 = por %p87, %p88
      %s90 = ssub.s32 %s26, %s33
      %p91 = scmp.eq.s32.totalorder %s90, 0
      %s93 = sadd.s32 %s92, 1
      %s94 = scalar_select %p91, %s92, %s93
      %p97 = pneg %p91
      %p98 = scmp.eq.s32.totalorder %s18, 1
      %p99 = por %p97, %p98
      %p100 = scmp.ne.s32.totalorder %s92, %s95
      %p101 = scmp.eq.s32.totalorder %s18, 0
      %p102 = por %p100, %p101
      %p103 = scmp.ne.s32.totalorder %s92, %s95
      %p104 = scmp.eq.s32.totalorder %s23, 1
      %p105 = por %p103, %p104
      %p106 = scmp.ne.s32.totalorder %s95, %s96
      %p107 = scmp.eq.s32.totalorder %s23, 0
      %p108 = por %p106, %p107
      %p109 = scmp.ne.s32.totalorder %s95, %s96
      %p110 = scmp.eq.s32.totalorder %s24, 1
      %p111 = por %p109, %p110
      %p113 = scmp.ne.s32.totalorder %s96, %s112
      %p114 = scmp.eq.s32.totalorder %s24, 0
      %p115 = por %p113, %p114
      %s116 = ssub.s32 %s26, %s33
      %p117 = scmp.eq.s32.totalorder %s116, 0
      %s119 = sadd.s32 %s118, 1
      %s120 = scalar_select %p117, %s118, %s119
      %p123 = pneg %p117
      %p124 = scmp.eq.s32.totalorder %s18, 1
      %p125 = por %p123, %p124
      %p126 = scmp.ne.s32.totalorder %s118, %s121
      %p127 = scmp.eq.s32.totalorder %s18, 0
      %p128 = por %p126, %p127
      %p129 = scmp.ne.s32.totalorder %s118, %s121
      %p130 = scmp.eq.s32.totalorder %s23, 1
      %p131 = por %p129, %p130
      %p132 = scmp.ne.s32.totalorder %s121, %s122
      %p133 = scmp.eq.s32.totalorder %s23, 0
      %p134 = por %p132, %p133
      %p135 = scmp.ne.s32.totalorder %s121, %s122
      %p136 = scmp.eq.s32.totalorder %s24, 1
      %p137 = por %p135, %p136
      %p139 = scmp.ne.s32.totalorder %s122, %s138
      %p140 = scmp.eq.s32.totalorder %s24, 0
      %p141 = por %p139, %p140
      %s142 = ssub.s32 %s26, %s33
      %p143 = scmp.eq.s32.totalorder %s142, 0
      %s145 = sadd.s32 %s144, 1
      %s146 = scalar_select %p143, %s144, %s145
      %p149 = pneg %p143
      %p150 = scmp.eq.s32.totalorder %s18, 1
      %p151 = por %p149, %p150
      %p152 = scmp.ne.s32.totalorder %s144, %s147
      %p153 = scmp.eq.s32.totalorder %s18, 0
      %p154 = por %p152, %p153
      %p155 = scmp.ne.s32.totalorder %s144, %s147
      %p156 = scmp.eq.s32.totalorder %s23, 1
      %p157 = por %p155, %p156
      %p158 = scmp.ne.s32.totalorder %s147, %s148
      %p159 = scmp.eq.s32.totalorder %s23, 0
      %p160 = por %p158, %p159
      %p161 = scmp.ne.s32.totalorder %s147, %s148
      %p162 = scmp.eq.s32.totalorder %s24, 1
      %p163 = por %p161, %p162
      %p165 = scmp.ne.s32.totalorder %s148, %s164
      %p166 = scmp.eq.s32.totalorder %s24, 0
      %p167 = por %p165, %p166
      %s168 = ssub.s32 %s26, %s33
      %p169 = scmp.eq.s32.totalorder %s168, 0
      %s171 = sadd.s32 %s170, 1
      %s172 = scalar_select %p169, %s170, %s171
      %p175 = pneg %p169
      %p176 = scmp.eq.s32.totalorder %s18, 1
      %p177 = por %p175, %p176
      %p178 = scmp.ne.s32.totalorder %s170, %s173
      %p179 = scmp.eq.s32.totalorder %s18, 0
      %p180 = por %p178, %p179
      %p181 = scmp.ne.s32.totalorder %s170, %s173
      %p182 = scmp.eq.s32.totalorder %s23, 1
      %p183 = por %p181, %p182
      %p184 = scmp.ne.s32.totalorder %s173, %s174
      %p185 = scmp.eq.s32.totalorder %s23, 0
      %p186 = por %p184, %p185
      %p187 = scmp.ne.s32.totalorder %s173, %s174
      %p188 = scmp.eq.s32.totalorder %s24, 1
      %p189 = por %p187, %p188
      %p191 = scmp.ne.s32.totalorder %s174, %s190
      %p192 = scmp.eq.s32.totalorder %s24, 0
      %p193 = por %p191, %p192
      %s194 = ssub.s32 %s26, %s33
      %p195 = scmp.eq.s32.totalorder %s194, 0
      %s197 = sadd.s32 %s196, 1
      %s198 = scalar_select %p195, %s196, %s197
      %p201 = pneg %p195
      %p202 = scmp.eq.s32.totalorder %s18, 1
      %p203 = por %p201, %p202
      %p204 = scmp.ne.s32.totalorder %s196, %s199
      %p205 = scmp.eq.s32.totalorder %s18, 0
      %p206 = por %p204, %p205
      %p207 = scmp.ne.s32.totalorder %s196, %s199
      %p208 = scmp.eq.s32.totalorder %s23, 1
      %p209 = por %p207, %p208
      %p210 = scmp.ne.s32.totalorder %s199, %s200
      %p211 = scmp.eq.s32.totalorder %s23, 0
      %p212 = por %p210, %p211
      %p213 = scmp.ne.s32.totalorder %s199, %s200
      %p214 = scmp.eq.s32.totalorder %s24, 1
      %p215 = por %p213, %p214
      %p217 = scmp.ne.s32.totalorder %s200, %s216
      %p218 = scmp.eq.s32.totalorder %s24, 0
      %p219 = por %p217, %p218
      %s220 = ssub.s32 %s26, %s33
      %p221 = scmp.eq.s32.totalorder %s220, 0
      %s223 = sadd.s32 %s222, 1
      %s224 = scalar_select %p221, %s222, %s223
      %p227 = pneg %p221
      %p228 = scmp.eq.s32.totalorder %s18, 1
      %p229 = por %p227, %p228
      %p230 = scmp.ne.s32.totalorder %s222, %s225
      %p231 = scmp.eq.s32.totalorder %s18, 0
      %p232 = por %p230, %p231
      %p233 = scmp.ne.s32.totalorder %s222, %s225
      %p234 = scmp.eq.s32.totalorder %s23, 1
      %p235 = por %p233, %p234
      %p236 = scmp.ne.s32.totalorder %s225, %s226
      %p237 = scmp.eq.s32.totalorder %s23, 0
      %p238 = por %p236, %p237
      %p239 = scmp.ne.s32.totalorder %s225, %s226
      %p240 = scmp.eq.s32.totalorder %s24, 1
      %p241 = por %p239, %p240
      %p243 = scmp.ne.s32.totalorder %s226, %s242
      %p244 = scmp.eq.s32.totalorder %s24, 0
      %p245 = por %p243, %p244
      %s246 = ssub.s32 %s26, %s33
      %p247 = scmp.eq.s32.totalorder %s246, 0
      %s249 = sadd.s32 %s248, 1
      %s250 = scalar_select %p247, %s248, %s249
      %p253 = pneg %p247
      %p254 = scmp.eq.s32.totalorder %s18, 1
      %p255 = por %p253, %p254
      %p256 = scmp.ne.s32.totalorder %s248, %s251
      %p257 = scmp.eq.s32.totalorder %s18, 0
      %p258 = por %p256, %p257
      %p259 = scmp.ne.s32.totalorder %s248, %s251
      %p260 = scmp.eq.s32.totalorder %s23, 1
      %p261 = por %p259, %p260
      %p262 = scmp.ne.s32.totalorder %s251, %s252
      %p263 = scmp.eq.s32.totalorder %s23, 0
      %p264 = por %p262, %p263
      %p265 = scmp.ne.s32.totalorder %s251, %s252
      %p266 = scmp.eq.s32.totalorder %s24, 1
      %p267 = por %p265, %p266
      %p269 = scmp.ne.s32.totalorder %s252, %s268
      %p270 = scmp.eq.s32.totalorder %s24, 0
      %p271 = por %p269, %p270
      %s272 = ssub.s32 %s26, %s33
      %p273 = scmp.eq.s32.totalorder %s272, 0
      %s275 = sadd.s32 %s274, 1
      %s276 = scalar_select %p273, %s274, %s275
      %p279 = pneg %p273
      %p280 = scmp.eq.s32.totalorder %s18, 1
      %p281 = por %p279, %p280
      %p282 = scmp.ne.s32.totalorder %s274, %s277
      %p283 = scmp.eq.s32.totalorder %s18, 0
      %p284 = por %p282, %p283
      %p285 = scmp.ne.s32.totalorder %s274, %s277
      %p286 = scmp.eq.s32.totalorder %s23, 1
      %p287 = por %p285, %p286
      %p288 = scmp.ne.s32.totalorder %s277, %s278
      %p289 = scmp.eq.s32.totalorder %s23, 0
      %p290 = por %p288, %p289
      %p291 = scmp.ne.s32.totalorder %s277, %s278
      %p292 = scmp.eq.s32.totalorder %s24, 1
      %p293 = por %p291, %p292
      %p295 = scmp.ne.s32.totalorder %s278, %s294
      %p296 = scmp.eq.s32.totalorder %s24, 0
      %p297 = por %p295, %p296
      %s299 = sadd.s32 %s298, 1
      %p302 = scmp.eq.s32.totalorder %s18, 1
      %p303 = scmp.ne.s32.totalorder %s298, %s300
      %p304 = scmp.eq.s32.totalorder %s18, 0
      %p305 = por %p303, %p304
      %p306 = scmp.ne.s32.totalorder %s298, %s300
      %p307 = scmp.eq.s32.totalorder %s23, 1
      %p308 = por %p306, %p307
      %p309 = scmp.ne.s32.totalorder %s300, %s301
      %p310 = scmp.eq.s32.totalorder %s23, 0
      %p311 = por %p309, %p310
      %p312 = scmp.ne.s32.totalorder %s300, %s301
      %p313 = scmp.eq.s32.totalorder %s24, 1
      %p314 = por %p312, %p313
      %p316 = scmp.ne.s32.totalorder %s301, %s315
      %p317 = scmp.eq.s32.totalorder %s24, 0
      %p318 = por %p316, %p317
      %s319 = ssub.s32 %s25, %s37
      %p320 = scmp.eq.s32.totalorder %s319, 0
      %s322 = sadd.s32 %s321, 1
      %s323 = scalar_select %p320, %s321, %s322
      %p326 = pneg %p320
      %p327 = scmp.eq.s32.totalorder %s18, 1
      %p328 = por %p326, %p327
      %p329 = scmp.ne.s32.totalorder %s321, %s324
      %p330 = scmp.eq.s32.totalorder %s18, 0
      %p331 = por %p329, %p330
      %p332 = scmp.ne.s32.totalorder %s321, %s324
      %p333 = scmp.eq.s32.totalorder %s23, 1
      %p334 = por %p332, %p333
      %p335 = scmp.ne.s32.totalorder %s324, %s325
      %p336 = scmp.eq.s32.totalorder %s23, 0
      %p337 = por %p335, %p336
      %p338 = scmp.ne.s32.totalorder %s324, %s325
      %p339 = scmp.eq.s32.totalorder %s24, 1
      %p340 = por %p338, %p339
      %p342 = scmp.ne.s32.totalorder %s325, %s341
      %p343 = scmp.eq.s32.totalorder %s24, 0
      %p344 = por %p342, %p343
      %p345 = scmp.le.s32.totalorder 1, %s18
      %p346 = scmp.lt.s32.totalorder %s18, 3
      %p347 = pnand %p345, %p346
      %p348 = pneg %p347
      // Predicated region
      $region9: #{mamba_model_forward.1} parent=5 // pred_check
        _
      $region10: #{mamba_model_forward.1} parent=5 // pred_check_branch
        %350 = sbr.rel (%p347) target = $region12
      $region11: #{mamba_model_forward.1} parent=5 // pred_region
        %s351 = ssub.s32 %s18, 1
        // Predicated region
        $region13: #{mamba_model_forward.1} parent=11 // pred_check
          %p352 = pneg %p56
        $region14: #{mamba_model_forward.1} parent=11 // pred_check_branch
          %354 = sbr.rel (%p352) target = $region16
        $region15: #{mamba_model_forward.1} parent=11 // pred_region
          %s355 = smul.u32 2, %s27
          %p356 = scmp.lt.s32.totalorder %s355, 1
          %s357 = scalar_select %p356, %s355, 1
          %s358 = smul.addr %s357, 8
          %s359 = scalar_lea.vmem %s0, %s358
          %s360 = smul.u32 2, %s27
        $region16: #{mamba_model_forward.1} parent=11 // pred_fallthru
          _
        // Predicated region
        $region17: #{mamba_model_forward.1} parent=11 // pred_check
          %p361 = pneg %p311
        $region18: #{mamba_model_forward.1} parent=11 // pred_check_branch
          %363 = sbr.rel (%p361) target = $region20
        $region19: #{mamba_model_forward.1} parent=11 // pred_region
          _
        $region20: #{mamba_model_forward.1} parent=11 // pred_fallthru
          _
      $region12: #{mamba_model_forward.1} parent=5 // pred_fallthru
        _
      %p364 = scmp.lt.s32.totalorder %s18, 2
      // Predicated region
      $region21: #{mamba_model_forward.1} parent=5 // pred_check
        %p365 = pneg %p364
      $region22: #{mamba_model_forward.1} parent=5 // pred_check_branch
        %367 = sbr.rel (%p365) target = $region24
      $region23: #{mamba_model_forward.1} parent=5 // pred_region
        // Predicated region
        $region25: #{mamba_model_forward.1} parent=23 // pred_check
          %p368 = pneg %p76
        $region26: #{mamba_model_forward.1} parent=23 // pred_check_branch
          %370 = sbr.rel (%p368) target = $region28
        $region27: #{mamba_model_forward.1} parent=23 // pred_region
          %p371 = scmp.lt.s32.totalorder %s26, 1
          %s372 = scalar_select %p371, %s26, 1
          %s373 = scalar_lea.vmem %s1, %s372
        $region28: #{mamba_model_forward.1} parent=23 // pred_fallthru
          _
        // Predicated region
        $region29: #{mamba_model_forward.1} parent=23 // pred_check
          %p374 = pneg %p102
        $region30: #{mamba_model_forward.1} parent=23 // pred_check_branch
          %376 = sbr.rel (%p374) target = $region32
        $region31: #{mamba_model_forward.1} parent=23 // pred_region
          %p377 = scmp.lt.s32.totalorder %s26, 1
          %s378 = scalar_select %p377, %s26, 1
          %s379 = smul.addr %s378, 4
          %s380 = smul.addr %s379, 4
          %s381 = scalar_lea.vmem %s2, %s380
        $region32: #{mamba_model_forward.1} parent=23 // pred_fallthru
          _
        // Predicated region
        $region33: #{mamba_model_forward.1} parent=23 // pred_check
          %p382 = pneg %p128
        $region34: #{mamba_model_forward.1} parent=23 // pred_check_branch
          %384 = sbr.rel (%p382) target = $region36
        $region35: #{mamba_model_forward.1} parent=23 // pred_region
          %p385 = scmp.lt.s32.totalorder %s26, 1
          %s386 = scalar_select %p385, %s26, 1
          %s387 = smul.addr %s386, 4
          %s388 = scalar_lea.vmem %s3, %s387
        $region36: #{mamba_model_forward.1} parent=23 // pred_fallthru
          _
        // Predicated region
        $region37: #{mamba_model_forward.1} parent=23 // pred_check
          %p389 = pneg %p154
        $region38: #{mamba_model_forward.1} parent=23 // pred_check_branch
          %391 = sbr.rel (%p389) target = $region40
        $region39: #{mamba_model_forward.1} parent=23 // pred_region
          %p392 = scmp.lt.s32.totalorder %s26, 1
          %s393 = scalar_select %p392, %s26, 1
          %s394 = scalar_lea.vmem %s4, %s393
        $region40: #{mamba_model_forward.1} parent=23 // pred_fallthru
          _
        // Predicated region
        $region41: #{mamba_model_forward.1} parent=23 // pred_check
          %p395 = pneg %p180
        $region42: #{mamba_model_forward.1} parent=23 // pred_check_branch
          %397 = sbr.rel (%p395) target = $region44
        $region43: #{mamba_model_forward.1} parent=23 // pred_region
          %p398 = scmp.lt.s32.totalorder %s26, 1
          %s399 = scalar_select %p398, %s26, 1
          %s400 = smul.addr %s399, 8
          %s401 = smul.addr %s400, 4
          %s402 = scalar_lea.vmem %s5, %s401
        $region44: #{mamba_model_forward.1} parent=23 // pred_fallthru
          _
        // Predicated region
        $region45: #{mamba_model_forward.1} parent=23 // pred_check
          %p403 = pneg %p206
        $region46: #{mamba_model_forward.1} parent=23 // pred_check_branch
          %405 = sbr.rel (%p403) target = $region48
        $region47: #{mamba_model_forward.1} parent=23 // pred_region
          %p406 = scmp.lt.s32.totalorder %s26, 1
          %s407 = scalar_select %p406, %s26, 1
          %s408 = scalar_lea.vmem %s6, %s407
        $region48: #{mamba_model_forward.1} parent=23 // pred_fallthru
          _
        // Predicated region
        $region49: #{mamba_model_forward.1} parent=23 // pred_check
          %p409 = pneg %p232
        $region50: #{mamba_model_forward.1} parent=23 // pred_check_branch
          %411 = sbr.rel (%p409) target = $region52
        $region51: #{mamba_model_forward.1} parent=23 // pred_region
          %p412 = scmp.lt.s32.totalorder %s26, 1
          %s413 = scalar_select %p412, %s26, 1
          %s414 = smul.addr %s413, 8
          %s415 = scalar_lea.vmem %s7, %s414
        $region52: #{mamba_model_forward.1} parent=23 // pred_fallthru
          _
        // Predicated region
        $region53: #{mamba_model_forward.1} parent=23 // pred_check
          %p416 = pneg %p258
        $region54: #{mamba_model_forward.1} parent=23 // pred_check_branch
          %418 = sbr.rel (%p416) target = $region56
        $region55: #{mamba_model_forward.1} parent=23 // pred_region
          %p419 = scmp.lt.s32.totalorder %s26, 1
          %s420 = scalar_select %p419, %s26, 1
          %s421 = scalar_lea.vmem %s8, %s420
        $region56: #{mamba_model_forward.1} parent=23 // pred_fallthru
          _
        // Predicated region
        $region57: #{mamba_model_forward.1} parent=23 // pred_check
          %p422 = pneg %p284
        $region58: #{mamba_model_forward.1} parent=23 // pred_check_branch
          %424 = sbr.rel (%p422) target = $region60
        $region59: #{mamba_model_forward.1} parent=23 // pred_region
          %p425 = scmp.lt.s32.totalorder %s26, 1
          %s426 = scalar_select %p425, %s26, 1
          %s427 = smul.addr %s426, 8
          %s428 = smul.addr %s427, 4
          %s429 = scalar_lea.vmem %s9, %s428
        $region60: #{mamba_model_forward.1} parent=23 // pred_fallthru
          _
      $region24: #{mamba_model_forward.1} parent=5 // pred_fallthru
        _
      %p430 = scmp.le.s32.totalorder 1, %s18
      %p431 = scmp.lt.s32.totalorder %s18, 3
      %p432 = pnand %p430, %p431
      %p433 = pneg %p432
      // Predicated region
      $region61: #{mamba_model_forward.1} parent=5 // pred_check
        _
      $region62: #{mamba_model_forward.1} parent=5 // pred_check_branch
        %435 = sbr.rel (%p432) target = $region64
      $region63: #{mamba_model_forward.1} parent=5 // pred_region
        %s436 = ssub.s32 %s18, 1
        %s437 = smul.u32 2, %s27
        %p438 = scmp.lt.s32.totalorder %s437, 1
        %s439 = scalar_select %p438, %s437, 1
        %s440 = smul.addr %s439, 8
        %s441 = scalar_lea.vmem %s0, %s440
        %p442 = pneg %p56
        %p443 = pneg %p53
        %p444 = scmp.lt.s32.totalorder %s28, 1
        %s445 = scalar_select %p444, %s28, 1
        %s446 = scalar_lea.vmem %s1, %s445
        %p447 = pneg %p82
        %p448 = pneg %p79
        %p449 = scmp.lt.s32.totalorder %s28, 1
        %s450 = scalar_select %p449, %s28, 1
        %s451 = smul.addr %s450, 4
        %s452 = smul.addr %s451, 4
        %s453 = scalar_lea.vmem %s2, %s452
        %p454 = pneg %p108
        %p455 = pneg %p105
        %p456 = scmp.lt.s32.totalorder %s28, 1
        %s457 = scalar_select %p456, %s28, 1
        %s458 = smul.addr %s457, 4
        %s459 = scalar_lea.vmem %s3, %s458
        %p460 = pneg %p134
        %p461 = pneg %p131
        %p462 = scmp.lt.s32.totalorder %s28, 1
        %s463 = scalar_select %p462, %s28, 1
        %s464 = scalar_lea.vmem %s4, %s463
        %p465 = pneg %p160
        %p466 = pneg %p157
        %p467 = scmp.lt.s32.totalorder %s28, 1
        %s468 = scalar_select %p467, %s28, 1
        %s469 = smul.addr %s468, 8
        %s470 = smul.addr %s469, 4
        %s471 = scalar_lea.vmem %s5, %s470
        %p472 = pneg %p186
        %p473 = pneg %p183
        %p474 = scmp.lt.s32.totalorder %s28, 1
        %s475 = scalar_select %p474, %s28, 1
        %s476 = scalar_lea.vmem %s6, %s475
        %p477 = pneg %p212
        %p478 = pneg %p209
        %p479 = scmp.lt.s32.totalorder %s28, 1
        %s480 = scalar_select %p479, %s28, 1
        %s481 = smul.addr %s480, 8
        %s482 = scalar_lea.vmem %s7, %s481
        %p483 = pneg %p238
        %p484 = pneg %p235
        %p485 = scmp.lt.s32.totalorder %s28, 1
        %s486 = scalar_select %p485, %s28, 1
        %s487 = scalar_lea.vmem %s8, %s486
        %p488 = pneg %p264
        %p489 = pneg %p261
        %p490 = scmp.lt.s32.totalorder %s28, 1
        %s491 = scalar_select %p490, %s28, 1
        %s492 = smul.addr %s491, 8
        %s493 = smul.addr %s492, 4
        %s494 = scalar_lea.vmem %s9, %s493
        %p495 = pneg %p290
        %p496 = pneg %p287
        %p497 = pneg %p311
        %p498 = pneg %p308
        %p499 = pneg %p337
        %p500 = pneg %p334
        %s501 = smul.u32 2, %s27
        %p502 = scmp.lt.s32.totalorder %s501, 1
        %s503 = scalar_select %p502, %s501, 1
        %s504 = smul.addr %s503, 8
        %s505 = scalar_lea.vmem %s0, %s504
        %s506 = smul.u32 2, %s27
        %p507 = scmp.lt.s32.totalorder %s28, 1
        %s508 = scalar_select %p507, %s28, 1
        %s509 = scalar_lea.vmem %s1, %s508
        %p510 = scmp.lt.s32.totalorder %s28, 1
        %s511 = scalar_select %p510, %s28, 1
        %s512 = smul.addr %s511, 4
        %s513 = smul.addr %s512, 4
        %s514 = scalar_lea.vmem %s2, %s513
        %p515 = scmp.lt.s32.totalorder %s28, 1
        %s516 = scalar_select %p515, %s28, 1
        %s517 = smul.addr %s516, 4
        %s518 = scalar_lea.vmem %s3, %s517
        %p519 = scmp.lt.s32.totalorder %s28, 1
        %s520 = scalar_select %p519, %s28, 1
        %s521 = scalar_lea.vmem %s4, %s520
        %p522 = scmp.lt.s32.totalorder %s28, 1
        %s523 = scalar_select %p522, %s28, 1
        %s524 = smul.addr %s523, 8
        %s525 = smul.addr %s524, 4
        %s526 = scalar_lea.vmem %s5, %s525
        %p527 = scmp.lt.s32.totalorder %s28, 1
        %s528 = scalar_select %p527, %s28, 1
        %s529 = scalar_lea.vmem %s6, %s528
        %p530 = scmp.lt.s32.totalorder %s28, 1
        %s531 = scalar_select %p530, %s28, 1
        %s532 = smul.addr %s531, 8
        %s533 = scalar_lea.vmem %s7, %s532
        %p534 = scmp.lt.s32.totalorder %s28, 1
        %s535 = scalar_select %p534, %s28, 1
        %s536 = scalar_lea.vmem %s8, %s535
        %p537 = scmp.lt.s32.totalorder %s28, 1
        %s538 = scalar_select %p537, %s28, 1
        %s539 = smul.addr %s538, 8
        %s540 = smul.addr %s539, 4
        %s541 = scalar_lea.vmem %s9, %s540
        %s542 = smul.u32 2, %s27
        %p544 = scmp.eq.s32.totalorder %s28, 0
        // Predicated region
        $region65: #{mamba_model_forward.1} parent=63 // pred_check
          %p545 = pneg %p544
        $region66: #{mamba_model_forward.1} parent=63 // pred_check_branch
          %547 = sbr.rel (%p545) target = $region68
        $region67: #{mamba_model_forward.1} parent=63 // pred_region
          %v548 = vld [vmem:[%s505] sm:$0xff]
          %v549 = vld [vmem:[%s505 + $0x8] sm:$0xff]
          %vm550 = vcmask 261120
          %551 = vst.msk [vmem:[#allocation6] sm:$0xff] %vm550, %v548
          %552 = vst.msk [vmem:[#allocation6 + $0x8] sm:$0xff] %vm550, %v549
        $region68: #{mamba_model_forward.1} parent=63 // pred_fallthru
          _
        %v553 = vld [vmem:[#allocation6] sm:$0xff]
        %v554 = vld [vmem:[#allocation6 + $0x8] sm:$0xff]
        %v555 = vld [vmem:[%s509] sm:$0x1]
        %v556 = vmul.f32 %v553, %v553
        %v557 = vmul.f32 %v554, %v554
        %vm558 = vcmask 261120
        %v559 = vsel %vm558, %v556, 0.0
        %560 = vadd.xlane.f32.xlu0 %v559
        %v561 = vpop.xlane.xlu0 %560
        %v562 = vsel %vm558, %v557, 0.0
        %563 = vadd.xlane.f32.xlu0 %v562
        %v564 = vpop.xlane.xlu0 %563
        %v565 = vrcp.pop 32.0
        %v566 = vmul.f32 32.0, %v565
        %v567 = vsub.f32 1.0, %v566
        %v568 = vmul.f32 %v565, %v567
        %v569 = vadd.f32 %v565, %v568
        %vm570 = vweird.f32 %v565
        %v571 = vsel %vm570, %v565, %v569
        %v572 = vmul.f32 %v561, %v571
        %v573 = vmul.f32 %v564, %v571
        %v574 = vadd.f32 %v572, 1e-05
        %v575 = vadd.f32 %v573, 1e-05
        %v576 = vrsqrt.pop %v574
        %v577 = vmul.f32 %v576, %v574
        %v578 = vmul.f32 %v577, %v576
        %v579 = vmul.f32 0.5, %v578
        %v580 = vsub.f32 1.5, %v579
        %v581 = vmul.f32 %v576, %v580
        %vm582 = vweird.f32 %v574
        %vm583 = vweird.f32 %v576
        %vm584 = vmor %vm582, %vm583
        %v585 = vsel %vm584, %v576, %v581
        %v586 = vrsqrt.pop %v575
        %v587 = vmul.f32 %v586, %v575
        %v588 = vmul.f32 %v587, %v586
        %v589 = vmul.f32 0.5, %v588
        %v590 = vsub.f32 1.5, %v589
        %v591 = vmul.f32 %v586, %v590
        %vm592 = vweird.f32 %v575
        %vm593 = vweird.f32 %v586
        %vm594 = vmor %vm592, %vm593
        %v595 = vsel %vm594, %v586, %v591
        %v596 = vmul.f32 %v553, %v585
        %v597 = vmul.f32 %v554, %v595
        %v599 = vperm.slane %v555, 0
        %v601 = vmul.f32 %v596, %v599
        %v602 = vmul.f32 %v597, %v599
        %v603 = vpack.c.bf16 %v602, %v601
        %v604 = vld [vmem:[%s514] sm:$0xf]
        %v605 = vld [vmem:[%s514 + $0x4] sm:$0xf]
        %v606 = vld [vmem:[%s514 + $0x8] sm:$0xf]
        %v607 = vld [vmem:[%s514 + $0xc] sm:$0xf]
        %v612 = vunpack.c.l.b16 %v604
        %v613 = vunpack.c.l.b16 %v605
        %v614 = vunpack.c.l.b16 %v606
        %v615 = vunpack.c.l.b16 %v607
        %v616 = vpack.c.b16 %v613, %v612
        %v617 = vpack.c.b16 %v615, %v614
        %v621 = vsel %vm558, %v603, 0
        %623 = vmatpush.bf16.msra.mxu0 0
        %624 = vmatpush.bf16.msra.mxu0 0
        %625 = vmatpush.bf16.msra.mxu0 0
        %626 = vmatpush.bf16.msra.mxu0 0
        %627 = vmatpush.bf16.msra.mxu0 0
        %628 = vmatpush.bf16.msra.mxu0 0
        %629 = vmatpush.bf16.msra.mxu0 %v617
        %630 = vmatpush.bf16.msra.mxu0 %v616
        %631 = vmatmul.bf16.gmra.mxu0 %v621
        %v632 = vpop.f32.mrf.mxu0
        %v633 = vadd.f32 0.0, %v632
        %v634 = vpop.f32.mrf.mxu0
        %v635 = vadd.f32 0.0, %v634
        %636 = vdwg.mxu0
        %v637 = vld [vmem:[%s518] sm:$0xf]
        %vm640 = vcmask 1042432
        %v641 = vrot.slane %v633, 5
        %v642 = vrot.slane %v635, 5
        %v643 = vsel %vm640, %v641, %v642
        %v646 = vsel %vm640, 0.0, %v641
        %v647 = vlaneseq
        %v648 = vshrl.u32 %v647, 7
        %v649 = vadd.s32 %v648, 8
        %vm650 = vcmp.lt.s32.totalorder %v648, 0
        %v651 = vsub.s32 0, %v648
        %v652 = vsel %vm650, %v651, %v648
        %v653 = vshrl.u32 %v652, 3
        %v654 = vand.u32 %v652, 7
        %v655 = vsub.s32 0, %v654
        %v656 = vsel %vm650, %v655, %v654
        %vm657 = vcmp.lt.s32.totalorder %v649, 0
        %v658 = vsub.s32 0, %v649
        %v659 = vsel %vm657, %v658, %v649
        %v660 = vshrl.u32 %v659, 3
        %v661 = vand.u32 %v659, 7
        %v662 = vsub.s32 0, %v661
        %v663 = vsel %vm657, %v662, %v661
        %vm664 = vcmp.ne.s32.totalorder %v656, 0
        %vm665 = vcmp.ne.s32.totalorder %v663, 0
        %vm666 = vcmp.lt.s32.totalorder %v656, 0
        %vm667 = vcmp.lt.s32.totalorder %v663, 0
        %vm668 = vmand %vm666, %vm664
        %vm669 = vmand %vm667, %vm665
        %v670 = vadd.s32 %v656, 8
        %v671 = vadd.s32 %v663, 8
        %v672 = vsel %vm668, %v670, %v656
        %v673 = vsel %vm669, %v671, %v663
        %v674 = vperm.slane %v637, 3
        %v675 = vmul.f32 %v633, %v674
        %v676 = vmul.f32 %v635, %v674
        %vm677 = vcmp.ge.s32.totalorder %v672, 1
        %vm678 = vcmp.ge.s32.totalorder %v673, 1
        %vm680 = vcmask 1045504
        %v681 = vrot.slane %v646, 2
        %v682 = vrot.slane %v643, 2
        %v683 = vsel %vm680, %v681, %v682
        %v684 = vrot.slane %v642, 2
        %v685 = vsel %vm680, %v682, %v684
        %v688 = vsel %vm677, %v683, 0.0
        %v689 = vsel %vm678, %v685, 0.0
        %v690 = vperm.slane %v637, 2
        %v691 = vmul.f32 %v688, %v690
        %v692 = vmul.f32 %v689, %v690
        %v693 = vadd.f32 %v675, %v691
        %v694 = vadd.f32 %v676, %v692
        %vm695 = vcmp.ge.s32.totalorder %v672, 2
        %vm696 = vcmp.ge.s32.totalorder %v673, 2
        %vm697 = vcmask 1046528
        %v698 = vrot.slane %v646, 1
        %v699 = vrot.slane %v643, 1
        %v700 = vsel %vm697, %v698, %v699
        %v701 = vrot.slane %v642, 1
        %v702 = vsel %vm697, %v699, %v701
        %v705 = vsel %vm695, %v700, 0.0
        %v706 = vsel %vm696, %v702, 0.0
        %v707 = vperm.slane %v637, 1
        %v708 = vmul.f32 %v705, %v707
        %v709 = vmul.f32 %v706, %v707
        %v710 = vadd.f32 %v693, %v708
        %v711 = vadd.f32 %v694, %v709
        %vm712 = vcmp.ge.s32.totalorder %v672, 3
        %vm713 = vcmp.ge.s32.totalorder %v673, 3
        %v714 = vsel %vm712, %v646, 0.0
        %v715 = vsel %vm713, %v643, 0.0
        %v716 = vperm.slane %v637, 0
        %v717 = vmul.f32 %v714, %v716
        %v718 = vmul.f32 %v715, %v716
        %v719 = vadd.f32 %v710, %v717
        %v720 = vadd.f32 %v711, %v718
        %v721 = vld [vmem:[%s521] sm:$0x1]
        %v723 = vperm.slane %v721, 0
        %v725 = vadd.f32 %v719, %v723
        %v726 = vadd.f32 %v720, %v723
        %v727 = vxor.u32 %v725, 2147483648
        %v728 = vxor.u32 %v726, 2147483648
        %v729 = vmul.f32 %v727, 1.442695
        %v730 = vpow.pop %v729
        %v731 = vmul.f32 %v728, 1.442695
        %v732 = vpow.pop %v731
        %v733 = vadd.f32 %v730, 1.0
        %v734 = vadd.f32 %v732, 1.0
        %v735 = vrcp.pop %v733
        %v736 = vmul.f32 %v733, %v735
        %v737 = vsub.f32 1.0, %v736
        %v738 = vmul.f32 %v735, %v737
        %v739 = vadd.f32 %v735, %v738
        %vm740 = vweird.f32 %v733
        %vm741 = vweird.f32 %v735
        %vm742 = vmor %vm740, %vm741
        %v743 = vsel %vm742, %v735, %v739
        %v744 = vand.u32 2147483647, %v733
        %vm745 = vcmp.eq.f32.partialorder %v744, 8.507059e+37
        %v746 = vand.u32 %v733, 2147483648
        %v747 = vor.u32 1.1754944e-38, %v746
        %v748 = vsel %vm745, %v747, %v743
        %v749 = vmul.f32 1.0, %v748
        %v750 = vrcp.pop %v734
        %v751 = vmul.f32 %v734, %v750
        %v752 = vsub.f32 1.0, %v751
        %v753 = vmul.f32 %v750, %v752
        %v754 = vadd.f32 %v750, %v753
        %vm755 = vweird.f32 %v734
        %vm756 = vweird.f32 %v750
        %vm757 = vmor %vm755, %vm756
        %v758 = vsel %vm757, %v750, %v754
        %v759 = vand.u32 2147483647, %v734
        %vm760 = vcmp.eq.f32.partialorder %v759, 8.507059e+37
        %v761 = vand.u32 %v734, 2147483648
        %v762 = vor.u32 1.1754944e-38, %v761
        %v763 = vsel %vm760, %v762, %v758
        %v764 = vmul.f32 1.0, %v763
        %v765 = vmul.f32 %v725, %v749
        %v766 = vmul.f32 %v726, %v764
        %v767 = vpack.c.bf16 %v766, %v765
        %v768 = vld [vmem:[%s526] sm:$0xf]
        %v769 = vld [vmem:[%s526 + $0x4] sm:$0xf]
        %v770 = vld [vmem:[%s526 + $0x8] sm:$0xf]
        %v771 = vld [vmem:[%s526 + $0xc] sm:$0xf]
        %v772 = vld [vmem:[%s526 + $0x10] sm:$0xf]
        %v773 = vld [vmem:[%s526 + $0x14] sm:$0xf]
        %v774 = vld [vmem:[%s526 + $0x18] sm:$0xf]
        %v775 = vld [vmem:[%s526 + $0x1c] sm:$0xf]
        %v784 = vunpack.c.l.b16 %v768
        %v785 = vunpack.c.l.b16 %v769
        %v786 = vunpack.c.l.b16 %v770
        %v787 = vunpack.c.l.b16 %v771
        %v788 = vunpack.c.l.b16 %v772
        %v789 = vunpack.c.l.b16 %v773
        %v790 = vunpack.c.l.b16 %v774
        %v791 = vunpack.c.l.b16 %v775
        %v792 = vpack.c.b16 %v785, %v784
        %v793 = vpack.c.b16 %v787, %v786
        %v794 = vpack.c.b16 %v789, %v788
        %v795 = vpack.c.b16 %v791, %v790
        %vm800 = vcmask 523264
        %v802 = vsel %vm800, %v767, 0
        %804 = vmatpush.bf16.msra.mxu0 0
        %805 = vmatpush.bf16.msra.mxu0 0
        %806 = vmatpush.bf16.msra.mxu0 0
        %807 = vmatpush.bf16.msra.mxu0 0
        %808 = vmatpush.bf16.msra.mxu0 %v795
        %809 = vmatpush.bf16.msra.mxu0 %v794
        %810 = vmatpush.bf16.msra.mxu0 %v793
        %811 = vmatpush.bf16.msra.mxu0 %v792
        %812 = vmatmul.bf16.gmra.mxu0 %v802
        %v813 = vpop.f32.mrf.mxu0
        %v814 = vadd.f32 0.0, %v813
        %v815 = vpop.f32.mrf.mxu0
        %v816 = vadd.f32 0.0, %v815
        %817 = vdwg.mxu0
        %v818 = vld [vmem:[%s529] sm:$0x1]
        %v820 = vperm.slane %v818, 0
        %v822 = vadd.f32 %v814, %v820
        %v823 = vadd.f32 %v816, %v820
        %vm824 = vcmp.gt.f32.partialorder %v822, 20.0
        %vm825 = vcmp.gt.f32.partialorder %v823, 20.0
        %v826 = vmin.f32 %v822, 20.0
        %v827 = vmin.f32 %v823, 20.0
        %v828 = vmul.f32 %v826, 1.442695
        %v829 = vpow.pop %v828
        %v830 = vmul.f32 %v827, 1.442695
        %v831 = vpow.pop %v830
        %v832 = vadd.f32 %v829, 1.0
        %v833 = vlog2.pop %v832
        %v834 = vmul.f32 %v833, 0.6931472
        %v835 = vmul.f32 -0.5, %v829
        %v836 = vadd.f32 %v835, 1.0
        %v837 = vmul.f32 %v836, %v829
        %v838 = vand.u32 2147483647, %v829
        %vm839 = vcmp.lt.f32.partialorder %v838, 0.0004427343
        %v840 = vsel %vm839, %v837, %v834
        %v841 = vadd.f32 %v831, 1.0
        %v842 = vlog2.pop %v841
        %v843 = vmul.f32 %v842, 0.6931472
        %v844 = vmul.f32 -0.5, %v831
        %v845 = vadd.f32 %v844, 1.0
        %v846 = vmul.f32 %v845, %v831
        %v847 = vand.u32 2147483647, %v831
        %vm848 = vcmp.lt.f32.partialorder %v847, 0.0004427343
        %v849 = vsel %vm848, %v846, %v843
        %v850 = vsel %vm824, %v822, %v840
        %v851 = vsel %vm825, %v823, %v849
        %v852 = vld [vmem:[%s533] sm:$0xff]
        %v853 = vld [vmem:[%s536] sm:$0x1]
        %v854 = vmul.f32 %v850, %v765
        %v855 = vmul.f32 %v851, %v766
        %857 = vrot.lane.b32.xlu0 %v850, 64
        %v858 = vpop.permute.xlu0 %857
        %v860 = vsel %vm800, %v850, %v858
        %v862 = vrot.slane %v860, 1
        %v863 = vrot.slane %v860, 2
        %v864 = vrot.slane %v860, 3
        %v865 = vrot.slane %v860, 4
        %v866 = vrot.slane %v860, 5
        %v867 = vrot.slane %v860, 6
        %v868 = vrot.slane %v860, 7
        %v869 = vperm.slane %v860, 0
        %v870 = vperm.slane %v862, 0
        %v871 = vperm.slane %v863, 0
        %v872 = vperm.slane %v864, 0
        %v873 = vperm.slane %v865, 0
        %v874 = vperm.slane %v866, 0
        %v875 = vperm.slane %v867, 0
        %v876 = vperm.slane %v868, 0
        %v885 = vmul.f32 %v869, %v852
        %v886 = vmul.f32 %v870, %v852
        %v887 = vmul.f32 %v871, %v852
        %v888 = vmul.f32 %v872, %v852
        %v889 = vmul.f32 %v873, %v852
        %v890 = vmul.f32 %v874, %v852
        %v891 = vmul.f32 %v875, %v852
        %v892 = vmul.f32 %v876, %v852
        %v893 = vmul.f32 %v885, 1.442695
        %v894 = vpow.pop %v893
        %v895 = vmul.f32 %v886, 1.442695
        %v896 = vpow.pop %v895
        %v897 = vmul.f32 %v887, 1.442695
        %v898 = vpow.pop %v897
        %v899 = vmul.f32 %v888, 1.442695
        %v900 = vpow.pop %v899
        %v901 = vmul.f32 %v889, 1.442695
        %v902 = vpow.pop %v901
        %v903 = vmul.f32 %v890, 1.442695
        %v904 = vpow.pop %v903
        %v905 = vmul.f32 %v891, 1.442695
        %v906 = vpow.pop %v905
        %v907 = vmul.f32 %v892, 1.442695
        %v908 = vpow.pop %v907
        %v909 = vperm.slane %v814, 0
        %v910 = vlaneseq
        %v911 = vshrl.u32 %v910, 7
        %v912 = vadd.s32 %v911, 64
        %913 = vset.pattern.permute.xlu0 %v912
        %914 = vperm.xlu0 %913, %v909
        %v915 = vpop.permute.xlu0 %914
        %v916 = vperm.slane %v814, 1
        %v917 = vlaneseq
        %v918 = vshrl.u32 %v917, 7
        %v919 = vadd.s32 %v918, 64
        %920 = vset.pattern.permute.xlu0 %v919
        %921 = vperm.xlu0 %920, %v916
        %v922 = vpop.permute.xlu0 %921
        %v923 = vperm.slane %v814, 2
        %v924 = vlaneseq
        %v925 = vshrl.u32 %v924, 7
        %v926 = vadd.s32 %v925, 64
        %927 = vset.pattern.permute.xlu0 %v926
        %928 = vperm.xlu0 %927, %v923
        %v929 = vpop.permute.xlu0 %928
        %v930 = vperm.slane %v814, 3
        %v931 = vlaneseq
        %v932 = vshrl.u32 %v931, 7
        %v933 = vadd.s32 %v932, 64
        %934 = vset.pattern.permute.xlu0 %v933
        %935 = vperm.xlu0 %934, %v930
        %v936 = vpop.permute.xlu0 %935
        %v937 = vperm.slane %v814, 4
        %v938 = vlaneseq
        %v939 = vshrl.u32 %v938, 7
        %v940 = vadd.s32 %v939, 64
        %941 = vset.pattern.permute.xlu0 %v940
        %942 = vperm.xlu0 %941, %v937
        %v943 = vpop.permute.xlu0 %942
        %v944 = vperm.slane %v814, 5
        %v945 = vlaneseq
        %v946 = vshrl.u32 %v945, 7
        %v947 = vadd.s32 %v946, 64
        %948 = vset.pattern.permute.xlu0 %v947
        %949 = vperm.xlu0 %948, %v944
        %v950 = vpop.permute.xlu0 %949
        %v951 = vperm.slane %v814, 6
        %v952 = vlaneseq
        %v953 = vshrl.u32 %v952, 7
        %v954 = vadd.s32 %v953, 64
        %955 = vset.pattern.permute.xlu0 %v954
        %956 = vperm.xlu0 %955, %v951
        %v957 = vpop.permute.xlu0 %956
        %v958 = vperm.slane %v814, 7
        %v959 = vlaneseq
        %v960 = vshrl.u32 %v959, 7
        %v961 = vadd.s32 %v960, 64
        %962 = vset.pattern.permute.xlu0 %v961
        %963 = vperm.xlu0 %962, %v958
        %v964 = vpop.permute.xlu0 %963
        %v966 = vrot.slane %v854, 1
        %v967 = vrot.slane %v854, 2
        %v968 = vrot.slane %v854, 3
        %v969 = vrot.slane %v854, 4
        %v970 = vrot.slane %v854, 5
        %v971 = vrot.slane %v854, 6
        %v972 = vrot.slane %v854, 7
        %v973 = vperm.slane %v854, 0
        %v974 = vperm.slane %v966, 0
        %v975 = vperm.slane %v967, 0
        %v976 = vperm.slane %v968, 0
        %v977 = vperm.slane %v969, 0
        %v978 = vperm.slane %v970, 0
        %v979 = vperm.slane %v971, 0
        %v980 = vperm.slane %v972, 0
        %v989 = vmul.f32 %v915, %v973
        %v990 = vmul.f32 %v922, %v974
        %v991 = vmul.f32 %v929, %v975
        %v992 = vmul.f32 %v936, %v976
        %v993 = vmul.f32 %v943, %v977
        %v994 = vmul.f32 %v950, %v978
        %v995 = vmul.f32 %v957, %v979
        %v996 = vmul.f32 %v964, %v980
        %v997 = vlaneseq
        %v998 = vshrl.u32 %v997, 7
        %v999 = vadd.s32 %v998, 72
        %1000 = vset.pattern.permute.xlu0 %v999
        %1001 = vperm.xlu0 %1000, %v909
        %v1002 = vpop.permute.xlu0 %1001
        %v1003 = vlaneseq
        %v1004 = vshrl.u32 %v1003, 7
        %v1005 = vadd.s32 %v1004, 72
        %1006 = vset.pattern.permute.xlu0 %v1005
        %1007 = vperm.xlu0 %1006, %v916
        %v1008 = vpop.permute.xlu0 %1007
        %v1009 = vlaneseq
        %v1010 = vshrl.u32 %v1009, 7
        %v1011 = vadd.s32 %v1010, 72
        %1012 = vset.pattern.permute.xlu0 %v1011
        %1013 = vperm.xlu0 %1012, %v923
        %v1014 = vpop.permute.xlu0 %1013
        %v1015 = vlaneseq
        %v1016 = vshrl.u32 %v1015, 7
        %v1017 = vadd.s32 %v1016, 72
        %1018 = vset.pattern.permute.xlu0 %v1017
        %1019 = vperm.xlu0 %1018, %v930
        %v1020 = vpop.permute.xlu0 %1019
        %v1021 = vlaneseq
        %v1022 = vshrl.u32 %v1021, 7
        %v1023 = vadd.s32 %v1022, 72
        %1024 = vset.pattern.permute.xlu0 %v1023
        %1025 = vperm.xlu0 %1024, %v937
        %v1026 = vpop.permute.xlu0 %1025
        %v1027 = vlaneseq
        %v1028 = vshrl.u32 %v1027, 7
        %v1029 = vadd.s32 %v1028, 72
        %1030 = vset.pattern.permute.xlu0 %v1029
        %1031 = vperm.xlu0 %1030, %v944
        %v1032 = vpop.permute.xlu0 %1031
        %v1033 = vlaneseq
        %v1034 = vshrl.u32 %v1033, 7
        %v1035 = vadd.s32 %v1034, 72
        %1036 = vset.pattern.permute.xlu0 %v1035
        %1037 = vperm.xlu0 %1036, %v951
        %v1038 = vpop.permute.xlu0 %1037
        %v1039 = vlaneseq
        %v1040 = vshrl.u32 %v1039, 7
        %v1041 = vadd.s32 %v1040, 72
        %1042 = vset.pattern.permute.xlu0 %v1041
        %1043 = vperm.xlu0 %1042, %v958
        %v1044 = vpop.permute.xlu0 %1043
        %v1045 = vmul.f32 %v1002, %v973
        %v1046 = vmul.f32 %v1008, %v974
        %v1047 = vmul.f32 %v1014, %v975
        %v1048 = vmul.f32 %v1020, %v976
        %v1049 = vmul.f32 %v1026, %v977
        %v1050 = vmul.f32 %v1032, %v978
        %v1051 = vmul.f32 %v1038, %v979
        %v1052 = vmul.f32 %v1044, %v980
        %1061 = vrot.lane.b32.xlu0 %v1045, 64
        %v1062 = vpop.permute.xlu0 %1061
        %1063 = vrot.lane.b32.xlu0 %v1046, 64
        %v1064 = vpop.permute.xlu0 %1063
        %1065 = vrot.lane.b32.xlu0 %v1047, 64
        %v1066 = vpop.permute.xlu0 %1065
        %1067 = vrot.lane.b32.xlu0 %v1048, 64
        %v1068 = vpop.permute.xlu0 %1067
        %1069 = vrot.lane.b32.xlu0 %v1049, 64
        %v1070 = vpop.permute.xlu0 %1069
        %1071 = vrot.lane.b32.xlu0 %v1050, 64
        %v1072 = vpop.permute.xlu0 %1071
        %1073 = vrot.lane.b32.xlu0 %v1051, 64
        %v1074 = vpop.permute.xlu0 %1073
        %1075 = vrot.lane.b32.xlu0 %v1052, 64
        %v1076 = vpop.permute.xlu0 %1075
        %v1085 = vsel %vm800, %v989, %v1062
        %v1086 = vsel %vm800, %v990, %v1064
        %v1087 = vsel %vm800, %v991, %v1066
        %v1088 = vsel %vm800, %v992, %v1068
        %v1089 = vsel %vm800, %v993, %v1070
        %v1090 = vsel %vm800, %v994, %v1072
        %v1091 = vsel %vm800, %v995, %v1074
        %v1092 = vsel %vm800, %v996, %v1076
        %1093 = vst [vmem:[#allocation2] sm:$0xff] %v894
        %1094 = vst [vmem:[#allocation2 + $0x10] sm:$0xff] %v896
        %1095 = vst [vmem:[#allocation2 + $0x20] sm:$0xff] %v898
        %1096 = vst [vmem:[#allocation2 + $0x30] sm:$0xff] %v900
        %1097 = vst [vmem:[#allocation2 + $0x40] sm:$0xff] %v902
        %1098 = vst [vmem:[#allocation2 + $0x50] sm:$0xff] %v904
        %1099 = vst [vmem:[#allocation2 + $0x60] sm:$0xff] %v906
        %1100 = vst [vmem:[#allocation2 + $0x70] sm:$0xff] %v908
        %1101 = vst [vmem:[#allocation3] sm:$0xff] %v1085
        %1102 = vst [vmem:[#allocation3 + $0x10] sm:$0xff] %v1086
        %1103 = vst [vmem:[#allocation3 + $0x20] sm:$0xff] %v1087
        %1104 = vst [vmem:[#allocation3 + $0x30] sm:$0xff] %v1088
        %1105 = vst [vmem:[#allocation3 + $0x40] sm:$0xff] %v1089
        %1106 = vst [vmem:[#allocation3 + $0x50] sm:$0xff] %v1090
        %1107 = vst [vmem:[#allocation3 + $0x60] sm:$0xff] %v1091
        %1108 = vst [vmem:[#allocation3 + $0x70] sm:$0xff] %v1092
        %1110 = vrot.lane.b32.xlu0 %v851, 64
        %v1111 = vpop.permute.xlu0 %1110
        %v1113 = vsel %vm800, %v851, %v1111
        %v1115 = vrot.slane %v1113, 1
        %v1116 = vrot.slane %v1113, 2
        %v1117 = vrot.slane %v1113, 3
        %v1118 = vrot.slane %v1113, 4
        %v1119 = vrot.slane %v1113, 5
        %v1120 = vrot.slane %v1113, 6
        %v1121 = vrot.slane %v1113, 7
        %v1122 = vperm.slane %v1113, 0
        %v1123 = vperm.slane %v1115, 0
        %v1124 = vperm.slane %v1116, 0
        %v1125 = vperm.slane %v1117, 0
        %v1126 = vperm.slane %v1118, 0
        %v1127 = vperm.slane %v1119, 0
        %v1128 = vperm.slane %v1120, 0
        %v1129 = vperm.slane %v1121, 0
        %v1138 = vmul.f32 %v1122, %v852
        %v1139 = vmul.f32 %v1123, %v852
        %v1140 = vmul.f32 %v1124, %v852
        %v1141 = vmul.f32 %v1125, %v852
        %v1142 = vmul.f32 %v1126, %v852
        %v1143 = vmul.f32 %v1127, %v852
        %v1144 = vmul.f32 %v1128, %v852
        %v1145 = vmul.f32 %v1129, %v852
        %v1146 = vmul.f32 %v1138, 1.442695
        %v1147 = vpow.pop %v1146
        %v1148 = vmul.f32 %v1139, 1.442695
        %v1149 = vpow.pop %v1148
        %v1150 = vmul.f32 %v1140, 1.442695
        %v1151 = vpow.pop %v1150
        %v1152 = vmul.f32 %v1141, 1.442695
        %v1153 = vpow.pop %v1152
        %v1154 = vmul.f32 %v1142, 1.442695
        %v1155 = vpow.pop %v1154
        %v1156 = vmul.f32 %v1143, 1.442695
        %v1157 = vpow.pop %v1156
        %v1158 = vmul.f32 %v1144, 1.442695
        %v1159 = vpow.pop %v1158
        %v1160 = vmul.f32 %v1145, 1.442695
        %v1161 = vpow.pop %v1160
        %v1162 = vperm.slane %v816, 0
        %v1163 = vlaneseq
        %v1164 = vshrl.u32 %v1163, 7
        %v1165 = vadd.s32 %v1164, 64
        %1166 = vset.pattern.permute.xlu0 %v1165
        %1167 = vperm.xlu0 %1166, %v1162
        %v1168 = vpop.permute.xlu0 %1167
        %v1169 = vperm.slane %v816, 1
        %v1170 = vlaneseq
        %v1171 = vshrl.u32 %v1170, 7
        %v1172 = vadd.s32 %v1171, 64
        %1173 = vset.pattern.permute.xlu0 %v1172
        %1174 = vperm.xlu0 %1173, %v1169
        %v1175 = vpop.permute.xlu0 %1174
        %v1176 = vperm.slane %v816, 2
        %v1177 = vlaneseq
        %v1178 = vshrl.u32 %v1177, 7
        %v1179 = vadd.s32 %v1178, 64
        %1180 = vset.pattern.permute.xlu0 %v1179
        %1181 = vperm.xlu0 %1180, %v1176
        %v1182 = vpop.permute.xlu0 %1181
        %v1183 = vperm.slane %v816, 3
        %v1184 = vlaneseq
        %v1185 = vshrl.u32 %v1184, 7
        %v1186 = vadd.s32 %v1185, 64
        %1187 = vset.pattern.permute.xlu0 %v1186
        %1188 = vperm.xlu0 %1187, %v1183
        %v1189 = vpop.permute.xlu0 %1188
        %v1190 = vperm.slane %v816, 4
        %v1191 = vlaneseq
        %v1192 = vshrl.u32 %v1191, 7
        %v1193 = vadd.s32 %v1192, 64
        %1194 = vset.pattern.permute.xlu0 %v1193
        %1195 = vperm.xlu0 %1194, %v1190
        %v1196 = vpop.permute.xlu0 %1195
        %v1197 = vperm.slane %v816, 5
        %v1198 = vlaneseq
        %v1199 = vshrl.u32 %v1198, 7
        %v1200 = vadd.s32 %v1199, 64
        %1201 = vset.pattern.permute.xlu0 %v1200
        %1202 = vperm.xlu0 %1201, %v1197
        %v1203 = vpop.permute.xlu0 %1202
        %v1204 = vperm.slane %v816, 6
        %v1205 = vlaneseq
        %v1206 = vshrl.u32 %v1205, 7
        %v1207 = vadd.s32 %v1206, 64
        %1208 = vset.pattern.permute.xlu0 %v1207
        %1209 = vperm.xlu0 %1208, %v1204
        %v1210 = vpop.permute.xlu0 %1209
        %v1211 = vperm.slane %v816, 7
        %v1212 = vlaneseq
        %v1213 = vshrl.u32 %v1212, 7
        %v1214 = vadd.s32 %v1213, 64
        %1215 = vset.pattern.permute.xlu0 %v1214
        %1216 = vperm.xlu0 %1215, %v1211
        %v1217 = vpop.permute.xlu0 %1216
        %v1219 = vrot.slane %v855, 1
        %v1220 = vrot.slane %v855, 2
        %v1221 = vrot.slane %v855, 3
        %v1222 = vrot.slane %v855, 4
        %v1223 = vrot.slane %v855, 5
        %v1224 = vrot.slane %v855, 6
        %v1225 = vrot.slane %v855, 7
        %v1226 = vperm.slane %v855, 0
        %v1227 = vperm.slane %v1219, 0
        %v1228 = vperm.slane %v1220, 0
        %v1229 = vperm.slane %v1221, 0
        %v1230 = vperm.slane %v1222, 0
        %v1231 = vperm.slane %v1223, 0
        %v1232 = vperm.slane %v1224, 0
        %v1233 = vperm.slane %v1225, 0
        %v1242 = vmul.f32 %v1168, %v1226
        %v1243 = vmul.f32 %v1175, %v1227
        %v1244 = vmul.f32 %v1182, %v1228
        %v1245 = vmul.f32 %v1189, %v1229
        %v1246 = vmul.f32 %v1196, %v1230
        %v1247 = vmul.f32 %v1203, %v1231
        %v1248 = vmul.f32 %v1210, %v1232
        %v1249 = vmul.f32 %v1217, %v1233
        %v1250 = vlaneseq
        %v1251 = vshrl.u32 %v1250, 7
        %v1252 = vadd.s32 %v1251, 72
        %1253 = vset.pattern.permute.xlu0 %v1252
        %1254 = vperm.xlu0 %1253, %v1162
        %v1255 = vpop.permute.xlu0 %1254
        %v1256 = vlaneseq
        %v1257 = vshrl.u32 %v1256, 7
        %v1258 = vadd.s32 %v1257, 72
        %1259 = vset.pattern.permute.xlu0 %v1258
        %1260 = vperm.xlu0 %1259, %v1169
        %v1261 = vpop.permute.xlu0 %1260
        %v1262 = vlaneseq
        %v1263 = vshrl.u32 %v1262, 7
        %v1264 = vadd.s32 %v1263, 72
        %1265 = vset.pattern.permute.xlu0 %v1264
        %1266 = vperm.xlu0 %1265, %v1176
        %v1267 = vpop.permute.xlu0 %1266
        %v1268 = vlaneseq
        %v1269 = vshrl.u32 %v1268, 7
        %v1270 = vadd.s32 %v1269, 72
        %1271 = vset.pattern.permute.xlu0 %v1270
        %1272 = vperm.xlu0 %1271, %v1183
        %v1273 = vpop.permute.xlu0 %1272
        %v1274 = vlaneseq
        %v1275 = vshrl.u32 %v1274, 7
        %v1276 = vadd.s32 %v1275, 72
        %1277 = vset.pattern.permute.xlu0 %v1276
        %1278 = vperm.xlu0 %1277, %v1190
        %v1279 = vpop.permute.xlu0 %1278
        %v1280 = vlaneseq
        %v1281 = vshrl.u32 %v1280, 7
        %v1282 = vadd.s32 %v1281, 72
        %1283 = vset.pattern.permute.xlu0 %v1282
        %1284 = vperm.xlu0 %1283, %v1197
        %v1285 = vpop.permute.xlu0 %1284
        %v1286 = vlaneseq
        %v1287 = vshrl.u32 %v1286, 7
        %v1288 = vadd.s32 %v1287, 72
        %1289 = vset.pattern.permute.xlu0 %v1288
        %1290 = vperm.xlu0 %1289, %v1204
        %v1291 = vpop.permute.xlu0 %1290
        %v1292 = vlaneseq
        %v1293 = vshrl.u32 %v1292, 7
        %v1294 = vadd.s32 %v1293, 72
        %1295 = vset.pattern.permute.xlu0 %v1294
        %1296 = vperm.xlu0 %1295, %v1211
        %v1297 = vpop.permute.xlu0 %1296
        %v1298 = vmul.f32 %v1255, %v1226
        %v1299 = vmul.f32 %v1261, %v1227
        %v1300 = vmul.f32 %v1267, %v1228
        %v1301 = vmul.f32 %v1273, %v1229
        %v1302 = vmul.f32 %v1279, %v1230
        %v1303 = vmul.f32 %v1285, %v1231
        %v1304 = vmul.f32 %v1291, %v1232
        %v1305 = vmul.f32 %v1297, %v1233
        %1314 = vrot.lane.b32.xlu0 %v1298, 64
        %v1315 = vpop.permute.xlu0 %1314
        %1316 = vrot.lane.b32.xlu0 %v1299, 64
        %v1317 = vpop.permute.xlu0 %1316
        %1318 = vrot.lane.b32.xlu0 %v1300, 64
        %v1319 = vpop.permute.xlu0 %1318
        %1320 = vrot.lane.b32.xlu0 %v1301, 64
        %v1321 = vpop.permute.xlu0 %1320
        %1322 = vrot.lane.b32.xlu0 %v1302, 64
        %v1323 = vpop.permute.xlu0 %1322
        %1324 = vrot.lane.b32.xlu0 %v1303, 64
        %v1325 = vpop.permute.xlu0 %1324
        %1326 = vrot.lane.b32.xlu0 %v1304, 64
        %v1327 = vpop.permute.xlu0 %1326
        %1328 = vrot.lane.b32.xlu0 %v1305, 64
        %v1329 = vpop.permute.xlu0 %1328
        %v1338 = vsel %vm800, %v1242, %v1315
        %v1339 = vsel %vm800, %v1243, %v1317
        %v1340 = vsel %vm800, %v1244, %v1319
        %v1341 = vsel %vm800, %v1245, %v1321
        %v1342 = vsel %vm800, %v1246, %v1323
        %v1343 = vsel %vm800, %v1247, %v1325
        %v1344 = vsel %vm800, %v1248, %v1327
        %v1345 = vsel %vm800, %v1249, %v1329
        %1346 = vst [vmem:[#allocation2 + $0x8] sm:$0xff] %v1147
        %1347 = vst [vmem:[#allocation2 + $0x18] sm:$0xff] %v1149
        %1348 = vst [vmem:[#allocation2 + $0x28] sm:$0xff] %v1151
        %1349 = vst [vmem:[#allocation2 + $0x38] sm:$0xff] %v1153
        %1350 = vst [vmem:[#allocation2 + $0x48] sm:$0xff] %v1155
        %1351 = vst [vmem:[#allocation2 + $0x58] sm:$0xff] %v1157
        %1352 = vst [vmem:[#allocation2 + $0x68] sm:$0xff] %v1159
        %1353 = vst [vmem:[#allocation2 + $0x78] sm:$0xff] %v1161
        %1354 = vst [vmem:[#allocation3 + $0x8] sm:$0xff] %v1338
        %1355 = vst [vmem:[#allocation3 + $0x18] sm:$0xff] %v1339
        %1356 = vst [vmem:[#allocation3 + $0x28] sm:$0xff] %v1340
        %1357 = vst [vmem:[#allocation3 + $0x38] sm:$0xff] %v1341
        %1358 = vst [vmem:[#allocation3 + $0x48] sm:$0xff] %v1342
        %1359 = vst [vmem:[#allocation3 + $0x58] sm:$0xff] %v1343
        %1360 = vst [vmem:[#allocation3 + $0x68] sm:$0xff] %v1344
        %1361 = vst [vmem:[#allocation3 + $0x78] sm:$0xff] %v1345
        %v1362 = vld [vmem:[#allocation2] sm:$0xff]
        %v1363 = vld [vmem:[#allocation2 + $0x8] sm:$0xff]
        %v1364 = vmul.f32 %v1362, 0.0
        %v1365 = vmul.f32 %v1363, 0.0
        %v1366 = vld [vmem:[#allocation3] sm:$0xff]
        %v1367 = vld [vmem:[#allocation3 + $0x8] sm:$0xff]
        %v1368 = vadd.f32 %v1364, %v1366
        %v1369 = vadd.f32 %v1365, %v1367
        %1370 = vst [vmem:[#allocation4] sm:$0xff] %v1368
        %1371 = vst [vmem:[#allocation4 + $0x8] sm:$0xff] %v1369
        %s1372 = scalar_lea.vmem [#allocation2], 16
        %v1373 = vld [vmem:[%s1372] sm:$0xff]
        %v1374 = vld [vmem:[%s1372 + $0x8] sm:$0xff]
        %v1375 = vmul.f32 %v1373, %v1368
        %v1376 = vmul.f32 %v1374, %v1369
        %s1377 = scalar_lea.vmem [#allocation3], 16
        %v1378 = vld [vmem:[%s1377] sm:$0xff]
        %v1379 = vld [vmem:[%s1377 + $0x8] sm:$0xff]
        %v1380 = vadd.f32 %v1375, %v1378
        %v1381 = vadd.f32 %v1376, %v1379
        %s1382 = scalar_lea.vmem [#allocation4], 16
        %1383 = vst [vmem:[%s1382] sm:$0xff] %v1380
        %1384 = vst [vmem:[%s1382 + $0x8] sm:$0xff] %v1381
        %s1385 = scalar_lea.vmem [#allocation2], 32
        %v1386 = vld [vmem:[%s1385] sm:$0xff]
        %v1387 = vld [vmem:[%s1385 + $0x8] sm:$0xff]
        %v1388 = vmul.f32 %v1386, %v1380
        %v1389 = vmul.f32 %v1387, %v1381
        %s1390 = scalar_lea.vmem [#allocation3], 32
        %v1391 = vld [vmem:[%s1390] sm:$0xff]
        %v1392 = vld [vmem:[%s1390 + $0x8] sm:$0xff]
        %v1393 = vadd.f32 %v1388, %v1391
        %v1394 = vadd.f32 %v1389, %v1392
        %s1395 = scalar_lea.vmem [#allocation4], 32
        %1396 = vst [vmem:[%s1395] sm:$0xff] %v1393
        %1397 = vst [vmem:[%s1395 + $0x8] sm:$0xff] %v1394
        %s1398 = scalar_lea.vmem [#allocation2], 48
        %v1399 = vld [vmem:[%s1398] sm:$0xff]
        %v1400 = vld [vmem:[%s1398 + $0x8] sm:$0xff]
        %v1401 = vmul.f32 %v1399, %v1393
        %v1402 = vmul.f32 %v1400, %v1394
        %s1403 = scalar_lea.vmem [#allocation3], 48
        %v1404 = vld [vmem:[%s1403] sm:$0xff]
        %v1405 = vld [vmem:[%s1403 + $0x8] sm:$0xff]
        %v1406 = vadd.f32 %v1401, %v1404
        %v1407 = vadd.f32 %v1402, %v1405
        %s1408 = scalar_lea.vmem [#allocation4], 48
        %1409 = vst [vmem:[%s1408] sm:$0xff] %v1406
        %1410 = vst [vmem:[%s1408 + $0x8] sm:$0xff] %v1407
        %s1411 = scalar_lea.vmem [#allocation2], 64
        %v1412 = vld [vmem:[%s1411] sm:$0xff]
        %v1413 = vld [vmem:[%s1411 + $0x8] sm:$0xff]
        %v1414 = vmul.f32 %v1412, %v1406
        %v1415 = vmul.f32 %v1413, %v1407
        %s1416 = scalar_lea.vmem [#allocation3], 64
        %v1417 = vld [vmem:[%s1416] sm:$0xff]
        %v1418 = vld [vmem:[%s1416 + $0x8] sm:$0xff]
        %v1419 = vadd.f32 %v1414, %v1417
        %v1420 = vadd.f32 %v1415, %v1418
        %s1421 = scalar_lea.vmem [#allocation4], 64
        %1422 = vst [vmem:[%s1421] sm:$0xff] %v1419
        %1423 = vst [vmem:[%s1421 + $0x8] sm:$0xff] %v1420
        %s1424 = scalar_lea.vmem [#allocation2], 80
        %v1425 = vld [vmem:[%s1424] sm:$0xff]
        %v1426 = vld [vmem:[%s1424 + $0x8] sm:$0xff]
        %v1427 = vmul.f32 %v1425, %v1419
        %v1428 = vmul.f32 %v1426, %v1420
        %s1429 = scalar_lea.vmem [#allocation3], 80
        %v1430 = vld [vmem:[%s1429] sm:$0xff]
        %v1431 = vld [vmem:[%s1429 + $0x8] sm:$0xff]
        %v1432 = vadd.f32 %v1427, %v1430
        %v1433 = vadd.f32 %v1428, %v1431
        %s1434 = scalar_lea.vmem [#allocation4], 80
        %1435 = vst [vmem:[%s1434] sm:$0xff] %v1432
        %1436 = vst [vmem:[%s1434 + $0x8] sm:$0xff] %v1433
        %s1437 = scalar_lea.vmem [#allocation2], 96
        %v1438 = vld [vmem:[%s1437] sm:$0xff]
        %v1439 = vld [vmem:[%s1437 + $0x8] sm:$0xff]
        %v1440 = vmul.f32 %v1438, %v1432
        %v1441 = vmul.f32 %v1439, %v1433
        %s1442 = scalar_lea.vmem [#allocation3], 96
        %v1443 = vld [vmem:[%s1442] sm:$0xff]
        %v1444 = vld [vmem:[%s1442 + $0x8] sm:$0xff]
        %v1445 = vadd.f32 %v1440, %v1443
        %v1446 = vadd.f32 %v1441, %v1444
        %s1447 = scalar_lea.vmem [#allocation4], 96
        %1448 = vst [vmem:[%s1447] sm:$0xff] %v1445
        %1449 = vst [vmem:[%s1447 + $0x8] sm:$0xff] %v1446
        %s1450 = scalar_lea.vmem [#allocation2], 112
        %v1451 = vld [vmem:[%s1450] sm:$0xff]
        %v1452 = vld [vmem:[%s1450 + $0x8] sm:$0xff]
        %v1453 = vmul.f32 %v1451, %v1445
        %v1454 = vmul.f32 %v1452, %v1446
        %s1455 = scalar_lea.vmem [#allocation3], 112
        %v1456 = vld [vmem:[%s1455] sm:$0xff]
        %v1457 = vld [vmem:[%s1455 + $0x8] sm:$0xff]
        %v1458 = vadd.f32 %v1453, %v1456
        %v1459 = vadd.f32 %v1454, %v1457
        %s1460 = scalar_lea.vmem [#allocation4], 112
        %1461 = vst [vmem:[%s1460] sm:$0xff] %v1458
        %1462 = vst [vmem:[%s1460 + $0x8] sm:$0xff] %v1459
        %v1463 = vld [vmem:[#allocation4] sm:$0xff]
        %v1464 = vld [vmem:[#allocation4 + $0x10] sm:$0xff]
        %v1465 = vld [vmem:[#allocation4 + $0x20] sm:$0xff]
        %v1466 = vld [vmem:[#allocation4 + $0x30] sm:$0xff]
        %v1467 = vld [vmem:[#allocation4 + $0x40] sm:$0xff]
        %v1468 = vld [vmem:[#allocation4 + $0x50] sm:$0xff]
        %v1469 = vld [vmem:[#allocation4 + $0x60] sm:$0xff]
        %v1470 = vld [vmem:[#allocation4 + $0x70] sm:$0xff]
        %v1471 = vlaneseq
        %v1472 = vshrl.u32 %v1471, 7
        %v1473 = vadd.s32 %v1472, 80
        %1474 = vset.pattern.permute.xlu0 %v1473
        %1475 = vperm.xlu0 %1474, %v909
        %v1476 = vpop.permute.xlu0 %1475
        %v1477 = vlaneseq
        %v1478 = vshrl.u32 %v1477, 7
        %v1479 = vadd.s32 %v1478, 80
        %1480 = vset.pattern.permute.xlu0 %v1479
        %1481 = vperm.xlu0 %1480, %v916
        %v1482 = vpop.permute.xlu0 %1481
        %v1483 = vlaneseq
        %v1484 = vshrl.u32 %v1483, 7
        %v1485 = vadd.s32 %v1484, 80
        %1486 = vset.pattern.permute.xlu0 %v1485
        %1487 = vperm.xlu0 %1486, %v923
        %v1488 = vpop.permute.xlu0 %1487
        %v1489 = vlaneseq
        %v1490 = vshrl.u32 %v1489, 7
        %v1491 = vadd.s32 %v1490, 80
        %1492 = vset.pattern.permute.xlu0 %v1491
        %1493 = vperm.xlu0 %1492, %v930
        %v1494 = vpop.permute.xlu0 %1493
        %v1495 = vlaneseq
        %v1496 = vshrl.u32 %v1495, 7
        %v1497 = vadd.s32 %v1496, 80
        %1498 = vset.pattern.permute.xlu0 %v1497
        %1499 = vperm.xlu0 %1498, %v937
        %v1500 = vpop.permute.xlu0 %1499
        %v1501 = vlaneseq
        %v1502 = vshrl.u32 %v1501, 7
        %v1503 = vadd.s32 %v1502, 80
        %1504 = vset.pattern.permute.xlu0 %v1503
        %1505 = vperm.xlu0 %1504, %v944
        %v1506 = vpop.permute.xlu0 %1505
        %v1507 = vlaneseq
        %v1508 = vshrl.u32 %v1507, 7
        %v1509 = vadd.s32 %v1508, 80
        %1510 = vset.pattern.permute.xlu0 %v1509
        %1511 = vperm.xlu0 %1510, %v951
        %v1512 = vpop.permute.xlu0 %1511
        %v1513 = vlaneseq
        %v1514 = vshrl.u32 %v1513, 7
        %v1515 = vadd.s32 %v1514, 80
        %1516 = vset.pattern.permute.xlu0 %v1515
        %1517 = vperm.xlu0 %1516, %v958
        %v1518 = vpop.permute.xlu0 %1517
        %v1519 = vmul.f32 %v1463, %v1476
        %v1520 = vmul.f32 %v1464, %v1482
        %v1521 = vmul.f32 %v1465, %v1488
        %v1522 = vmul.f32 %v1466, %v1494
        %v1523 = vmul.f32 %v1467, %v1500
        %v1524 = vmul.f32 %v1468, %v1506
        %v1525 = vmul.f32 %v1469, %v1512
        %v1526 = vmul.f32 %v1470, %v1518
        %v1527 = vsel %vm800, %v1519, 0.0
        %v1528 = vrot.slane %v1527, 4
        %v1529 = vadd.f32 %v1527, %v1528
        %v1530 = vrot.slane %v1529, 2
        %v1531 = vadd.f32 %v1529, %v1530
        %v1532 = vrot.slane %v1531, 1
        %v1533 = vadd.f32 %v1531, %v1532
        %v1534 = vsel %vm800, %v1520, 0.0
        %v1535 = vrot.slane %v1534, 4
        %v1536 = vadd.f32 %v1534, %v1535
        %v1537 = vrot.slane %v1536, 2
        %v1538 = vadd.f32 %v1536, %v1537
        %v1539 = vrot.slane %v1538, 1
        %v1540 = vadd.f32 %v1538, %v1539
        %v1541 = vsel %vm800, %v1521, 0.0
        %v1542 = vrot.slane %v1541, 4
        %v1543 = vadd.f32 %v1541, %v1542
        %v1544 = vrot.slane %v1543, 2
        %v1545 = vadd.f32 %v1543, %v1544
        %v1546 = vrot.slane %v1545, 1
        %v1547 = vadd.f32 %v1545, %v1546
        %v1548 = vsel %vm800, %v1522, 0.0
        %v1549 = vrot.slane %v1548, 4
        %v1550 = vadd.f32 %v1548, %v1549
        %v1551 = vrot.slane %v1550, 2
        %v1552 = vadd.f32 %v1550, %v1551
        %v1553 = vrot.slane %v1552, 1
        %v1554 = vadd.f32 %v1552, %v1553
        %v1555 = vsel %vm800, %v1523, 0.0
        %v1556 = vrot.slane %v1555, 4
        %v1557 = vadd.f32 %v1555, %v1556
        %v1558 = vrot.slane %v1557, 2
        %v1559 = vadd.f32 %v1557, %v1558
        %v1560 = vrot.slane %v1559, 1
        %v1561 = vadd.f32 %v1559, %v1560
        %v1562 = vsel %vm800, %v1524, 0.0
        %v1563 = vrot.slane %v1562, 4
        %v1564 = vadd.f32 %v1562, %v1563
        %v1565 = vrot.slane %v1564, 2
        %v1566 = vadd.f32 %v1564, %v1565
        %v1567 = vrot.slane %v1566, 1
        %v1568 = vadd.f32 %v1566, %v1567
        %v1569 = vsel %vm800, %v1525, 0.0
        %v1570 = vrot.slane %v1569, 4
        %v1571 = vadd.f32 %v1569, %v1570
        %v1572 = vrot.slane %v1571, 2
        %v1573 = vadd.f32 %v1571, %v1572
        %v1574 = vrot.slane %v1573, 1
        %v1575 = vadd.f32 %v1573, %v1574
        %v1576 = vsel %vm800, %v1526, 0.0
        %v1577 = vrot.slane %v1576, 4
        %v1578 = vadd.f32 %v1576, %v1577
        %v1579 = vrot.slane %v1578, 2
        %v1580 = vadd.f32 %v1578, %v1579
        %v1581 = vrot.slane %v1580, 1
        %v1582 = vadd.f32 %v1580, %v1581
        %v1583 = vlaneseq
        %v1584 = vshrl.u32 %v1583, 7
        %v1585 = vadd.s32 %v1584, 88
        %1586 = vset.pattern.permute.xlu0 %v1585
        %1587 = vperm.xlu0 %1586, %v909
        %v1588 = vpop.permute.xlu0 %1587
        %v1589 = vlaneseq
        %v1590 = vshrl.u32 %v1589, 7
        %v1591 = vadd.s32 %v1590, 88
        %1592 = vset.pattern.permute.xlu0 %v1591
        %1593 = vperm.xlu0 %1592, %v916
        %v1594 = vpop.permute.xlu0 %1593
        %v1595 = vlaneseq
        %v1596 = vshrl.u32 %v1595, 7
        %v1597 = vadd.s32 %v1596, 88
        %1598 = vset.pattern.permute.xlu0 %v1597
        %1599 = vperm.xlu0 %1598, %v923
        %v1600 = vpop.permute.xlu0 %1599
        %v1601 = vlaneseq
        %v1602 = vshrl.u32 %v1601, 7
        %v1603 = vadd.s32 %v1602, 88
        %1604 = vset.pattern.permute.xlu0 %v1603
        %1605 = vperm.xlu0 %1604, %v930
        %v1606 = vpop.permute.xlu0 %1605
        %v1607 = vlaneseq
        %v1608 = vshrl.u32 %v1607, 7
        %v1609 = vadd.s32 %v1608, 88
        %1610 = vset.pattern.permute.xlu0 %v1609
        %1611 = vperm.xlu0 %1610, %v937
        %v1612 = vpop.permute.xlu0 %1611
        %v1613 = vlaneseq
        %v1614 = vshrl.u32 %v1613, 7
        %v1615 = vadd.s32 %v1614, 88
        %1616 = vset.pattern.permute.xlu0 %v1615
        %1617 = vperm.xlu0 %1616, %v944
        %v1618 = vpop.permute.xlu0 %1617
        %v1619 = vlaneseq
        %v1620 = vshrl.u32 %v1619, 7
        %v1621 = vadd.s32 %v1620, 88
        %1622 = vset.pattern.permute.xlu0 %v1621
        %1623 = vperm.xlu0 %1622, %v951
        %v1624 = vpop.permute.xlu0 %1623
        %v1625 = vlaneseq
        %v1626 = vshrl.u32 %v1625, 7
        %v1627 = vadd.s32 %v1626, 88
        %1628 = vset.pattern.permute.xlu0 %v1627
        %1629 = vperm.xlu0 %1628, %v958
        %v1630 = vpop.permute.xlu0 %1629
        %v1631 = vmul.f32 %v1463, %v1588
        %v1632 = vmul.f32 %v1464, %v1594
        %v1633 = vmul.f32 %v1465, %v1600
        %v1634 = vmul.f32 %v1466, %v1606
        %v1635 = vmul.f32 %v1467, %v1612
        %v1636 = vmul.f32 %v1468, %v1618
        %v1637 = vmul.f32 %v1469, %v1624
        %v1638 = vmul.f32 %v1470, %v1630
        %vm1639 = vcmask 1048064
        %v1640 = vsel %vm1639, %v1631, 0.0
        %v1641 = vrot.slane %v1640, 4
        %v1642 = vadd.f32 %v1640, %v1641
        %v1643 = vrot.slane %v1642, 2
        %v1644 = vadd.f32 %v1642, %v1643
        %v1645 = vrot.slane %v1644, 1
        %v1646 = vadd.f32 %v1644, %v1645
        %v1647 = vsel %vm1639, %v1632, 0.0
        %v1648 = vrot.slane %v1647, 4
        %v1649 = vadd.f32 %v1647, %v1648
        %v1650 = vrot.slane %v1649, 2
        %v1651 = vadd.f32 %v1649, %v1650
        %v1652 = vrot.slane %v1651, 1
        %v1653 = vadd.f32 %v1651, %v1652
        %v1654 = vsel %vm1639, %v1633, 0.0
        %v1655 = vrot.slane %v1654, 4
        %v1656 = vadd.f32 %v1654, %v1655
        %v1657 = vrot.slane %v1656, 2
        %v1658 = vadd.f32 %v1656, %v1657
        %v1659 = vrot.slane %v1658, 1
        %v1660 = vadd.f32 %v1658, %v1659
        %v1661 = vsel %vm1639, %v1634, 0.0
        %v1662 = vrot.slane %v1661, 4
        %v1663 = vadd.f32 %v1661, %v1662
        %v1664 = vrot.slane %v1663, 2
        %v1665 = vadd.f32 %v1663, %v1664
        %v1666 = vrot.slane %v1665, 1
        %v1667 = vadd.f32 %v1665, %v1666
        %v1668 = vsel %vm1639, %v1635, 0.0
        %v1669 = vrot.slane %v1668, 4
        %v1670 = vadd.f32 %v1668, %v1669
        %v1671 = vrot.slane %v1670, 2
        %v1672 = vadd.f32 %v1670, %v1671
        %v1673 = vrot.slane %v1672, 1
        %v1674 = vadd.f32 %v1672, %v1673
        %v1675 = vsel %vm1639, %v1636, 0.0
        %v1676 = vrot.slane %v1675, 4
        %v1677 = vadd.f32 %v1675, %v1676
        %v1678 = vrot.slane %v1677, 2
        %v1679 = vadd.f32 %v1677, %v1678
        %v1680 = vrot.slane %v1679, 1
        %v1681 = vadd.f32 %v1679, %v1680
        %v1682 = vsel %vm1639, %v1637, 0.0
        %v1683 = vrot.slane %v1682, 4
        %v1684 = vadd.f32 %v1682, %v1683
        %v1685 = vrot.slane %v1684, 2
        %v1686 = vadd.f32 %v1684, %v1685
        %v1687 = vrot.slane %v1686, 1
        %v1688 = vadd.f32 %v1686, %v1687
        %v1689 = vsel %vm1639, %v1638, 0.0
        %v1690 = vrot.slane %v1689, 4
        %v1691 = vadd.f32 %v1689, %v1690
        %v1692 = vrot.slane %v1691, 2
        %v1693 = vadd.f32 %v1691, %v1692
        %v1694 = vrot.slane %v1693, 1
        %v1695 = vadd.f32 %v1693, %v1694
        %1704 = vrot.lane.b32.xlu0 %v1646, 64
        %v1705 = vpop.permute.xlu0 %1704
        %1706 = vrot.lane.b32.xlu0 %v1653, 64
        %v1707 = vpop.permute.xlu0 %1706
        %1708 = vrot.lane.b32.xlu0 %v1660, 64
        %v1709 = vpop.permute.xlu0 %1708
        %1710 = vrot.lane.b32.xlu0 %v1667, 64
        %v1711 = vpop.permute.xlu0 %1710
        %1712 = vrot.lane.b32.xlu0 %v1674, 64
        %v1713 = vpop.permute.xlu0 %1712
        %1714 = vrot.lane.b32.xlu0 %v1681, 64
        %v1715 = vpop.permute.xlu0 %1714
        %1716 = vrot.lane.b32.xlu0 %v1688, 64
        %v1717 = vpop.permute.xlu0 %1716
        %1718 = vrot.lane.b32.xlu0 %v1695, 64
        %v1719 = vpop.permute.xlu0 %1718
        %v1728 = vadd.f32 %v1533, %v1705
        %v1729 = vadd.f32 %v1540, %v1707
        %v1730 = vadd.f32 %v1547, %v1709
        %v1731 = vadd.f32 %v1554, %v1711
        %v1732 = vadd.f32 %v1561, %v1713
        %v1733 = vadd.f32 %v1568, %v1715
        %v1734 = vadd.f32 %v1575, %v1717
        %v1735 = vadd.f32 %v1582, %v1719
        %v1737 = vperm.slane %v853, 0
        %v1739 = vmul.f32 %v1737, %v765
        %v1741 = vrot.slane %v1739, 1
        %v1742 = vrot.slane %v1739, 2
        %v1743 = vrot.slane %v1739, 3
        %v1744 = vrot.slane %v1739, 4
        %v1745 = vrot.slane %v1739, 5
        %v1746 = vrot.slane %v1739, 6
        %v1747 = vrot.slane %v1739, 7
        %v1756 = vadd.f32 %v1728, %v1739
        %v1757 = vadd.f32 %v1729, %v1741
        %v1758 = vadd.f32 %v1730, %v1742
        %v1759 = vadd.f32 %v1731, %v1743
        %v1760 = vadd.f32 %v1732, %v1744
        %v1761 = vadd.f32 %v1733, %v1745
        %v1762 = vadd.f32 %v1734, %v1746
        %v1763 = vadd.f32 %v1735, %v1747
        %v1772 = vrot.slane %v1757, 7
        %vm1773 = vcmask 1041409
        %v1774 = vsel %vm1773, %v1772, %v1756
        %v1775 = vrot.slane %v1758, 6
        %vm1776 = vcmask 1042434
        %v1777 = vsel %vm1776, %v1775, %v1774
        %v1778 = vrot.slane %v1759, 5
        %vm1779 = vcmask 1043459
        %v1780 = vsel %vm1779, %v1778, %v1777
        %v1781 = vrot.slane %v1760, 4
        %vm1782 = vcmask 1044484
        %v1783 = vsel %vm1782, %v1781, %v1780
        %v1784 = vrot.slane %v1761, 3
        %vm1785 = vcmask 1045509
        %v1786 = vsel %vm1785, %v1784, %v1783
        %v1787 = vrot.slane %v1762, 2
        %vm1788 = vcmask 1046534
        %v1789 = vsel %vm1788, %v1787, %v1786
        %v1790 = vrot.slane %v1763, 1
        %vm1791 = vcmask 1047559
        %v1792 = vsel %vm1791, %v1790, %v1789
        %1794 = vst.msk [vmem:[#allocation5] sm:$0xff] %vm800, %v1792
        %v1795 = vld [vmem:[#allocation4 + $0x8] sm:$0xff]
        %v1796 = vld [vmem:[#allocation4 + $0x18] sm:$0xff]
        %v1797 = vld [vmem:[#allocation4 + $0x28] sm:$0xff]
        %v1798 = vld [vmem:[#allocation4 + $0x38] sm:$0xff]
        %v1799 = vld [vmem:[#allocation4 + $0x48] sm:$0xff]
        %v1800 = vld [vmem:[#allocation4 + $0x58] sm:$0xff]
        %v1801 = vld [vmem:[#allocation4 + $0x68] sm:$0xff]
        %v1802 = vld [vmem:[#allocation4 + $0x78] sm:$0xff]
        %v1803 = vlaneseq
        %v1804 = vshrl.u32 %v1803, 7
        %v1805 = vadd.s32 %v1804, 80
        %1806 = vset.pattern.permute.xlu0 %v1805
        %1807 = vperm.xlu0 %1806, %v1162
        %v1808 = vpop.permute.xlu0 %1807
        %v1809 = vlaneseq
        %v1810 = vshrl.u32 %v1809, 7
        %v1811 = vadd.s32 %v1810, 80
        %1812 = vset.pattern.permute.xlu0 %v1811
        %1813 = vperm.xlu0 %1812, %v1169
        %v1814 = vpop.permute.xlu0 %1813
        %v1815 = vlaneseq
        %v1816 = vshrl.u32 %v1815, 7
        %v1817 = vadd.s32 %v1816, 80
        %1818 = vset.pattern.permute.xlu0 %v1817
        %1819 = vperm.xlu0 %1818, %v1176
        %v1820 = vpop.permute.xlu0 %1819
        %v1821 = vlaneseq
        %v1822 = vshrl.u32 %v1821, 7
        %v1823 = vadd.s32 %v1822, 80
        %1824 = vset.pattern.permute.xlu0 %v1823
        %1825 = vperm.xlu0 %1824, %v1183
        %v1826 = vpop.permute.xlu0 %1825
        %v1827 = vlaneseq
        %v1828 = vshrl.u32 %v1827, 7
        %v1829 = vadd.s32 %v1828, 80
        %1830 = vset.pattern.permute.xlu0 %v1829
        %1831 = vperm.xlu0 %1830, %v1190
        %v1832 = vpop.permute.xlu0 %1831
        %v1833 = vlaneseq
        %v1834 = vshrl.u32 %v1833, 7
        %v1835 = vadd.s32 %v1834, 80
        %1836 = vset.pattern.permute.xlu0 %v1835
        %1837 = vperm.xlu0 %1836, %v1197
        %v1838 = vpop.permute.xlu0 %1837
        %v1839 = vlaneseq
        %v1840 = vshrl.u32 %v1839, 7
        %v1841 = vadd.s32 %v1840, 80
        %1842 = vset.pattern.permute.xlu0 %v1841
        %1843 = vperm.xlu0 %1842, %v1204
        %v1844 = vpop.permute.xlu0 %1843
        %v1845 = vlaneseq
        %v1846 = vshrl.u32 %v1845, 7
        %v1847 = vadd.s32 %v1846, 80
        %1848 = vset.pattern.permute.xlu0 %v1847
        %1849 = vperm.xlu0 %1848, %v1211
        %v1850 = vpop.permute.xlu0 %1849
        %v1851 = vmul.f32 %v1795, %v1808
        %v1852 = vmul.f32 %v1796, %v1814
        %v1853 = vmul.f32 %v1797, %v1820
        %v1854 = vmul.f32 %v1798, %v1826
        %v1855 = vmul.f32 %v1799, %v1832
        %v1856 = vmul.f32 %v1800, %v1838
        %v1857 = vmul.f32 %v1801, %v1844
        %v1858 = vmul.f32 %v1802, %v1850
        %v1859 = vsel %vm800, %v1851, 0.0
        %v1860 = vrot.slane %v1859, 4
        %v1861 = vadd.f32 %v1859, %v1860
        %v1862 = vrot.slane %v1861, 2
        %v1863 = vadd.f32 %v1861, %v1862
        %v1864 = vrot.slane %v1863, 1
        %v1865 = vadd.f32 %v1863, %v1864
        %v1866 = vsel %vm800, %v1852, 0.0
        %v1867 = vrot.slane %v1866, 4
        %v1868 = vadd.f32 %v1866, %v1867
        %v1869 = vrot.slane %v1868, 2
        %v1870 = vadd.f32 %v1868, %v1869
        %v1871 = vrot.slane %v1870, 1
        %v1872 = vadd.f32 %v1870, %v1871
        %v1873 = vsel %vm800, %v1853, 0.0
        %v1874 = vrot.slane %v1873, 4
        %v1875 = vadd.f32 %v1873, %v1874
        %v1876 = vrot.slane %v1875, 2
        %v1877 = vadd.f32 %v1875, %v1876
        %v1878 = vrot.slane %v1877, 1
        %v1879 = vadd.f32 %v1877, %v1878
        %v1880 = vsel %vm800, %v1854, 0.0
        %v1881 = vrot.slane %v1880, 4
        %v1882 = vadd.f32 %v1880, %v1881
        %v1883 = vrot.slane %v1882, 2
        %v1884 = vadd.f32 %v1882, %v1883
        %v1885 = vrot.slane %v1884, 1
        %v1886 = vadd.f32 %v1884, %v1885
        %v1887 = vsel %vm800, %v1855, 0.0
        %v1888 = vrot.slane %v1887, 4
        %v1889 = vadd.f32 %v1887, %v1888
        %v1890 = vrot.slane %v1889, 2
        %v1891 = vadd.f32 %v1889, %v1890
        %v1892 = vrot.slane %v1891, 1
        %v1893 = vadd.f32 %v1891, %v1892
        %v1894 = vsel %vm800, %v1856, 0.0
        %v1895 = vrot.slane %v1894, 4
        %v1896 = vadd.f32 %v1894, %v1895
        %v1897 = vrot.slane %v1896, 2
        %v1898 = vadd.f32 %v1896, %v1897
        %v1899 = vrot.slane %v1898, 1
        %v1900 = vadd.f32 %v1898, %v1899
        %v1901 = vsel %vm800, %v1857, 0.0
        %v1902 = vrot.slane %v1901, 4
        %v1903 = vadd.f32 %v1901, %v1902
        %v1904 = vrot.slane %v1903, 2
        %v1905 = vadd.f32 %v1903, %v1904
        %v1906 = vrot.slane %v1905, 1
        %v1907 = vadd.f32 %v1905, %v1906
        %v1908 = vsel %vm800, %v1858, 0.0
        %v1909 = vrot.slane %v1908, 4
        %v1910 = vadd.f32 %v1908, %v1909
        %v1911 = vrot.slane %v1910, 2
        %v1912 = vadd.f32 %v1910, %v1911
        %v1913 = vrot.slane %v1912, 1
        %v1914 = vadd.f32 %v1912, %v1913
        %v1915 = vlaneseq
        %v1916 = vshrl.u32 %v1915, 7
        %v1917 = vadd.s32 %v1916, 88
        %1918 = vset.pattern.permute.xlu0 %v1917
        %1919 = vperm.xlu0 %1918, %v1162
        %v1920 = vpop.permute.xlu0 %1919
        %v1921 = vlaneseq
        %v1922 = vshrl.u32 %v1921, 7
        %v1923 = vadd.s32 %v1922, 88
        %1924 = vset.pattern.permute.xlu0 %v1923
        %1925 = vperm.xlu0 %1924, %v1169
        %v1926 = vpop.permute.xlu0 %1925
        %v1927 = vlaneseq
        %v1928 = vshrl.u32 %v1927, 7
        %v1929 = vadd.s32 %v1928, 88
        %1930 = vset.pattern.permute.xlu0 %v1929
        %1931 = vperm.xlu0 %1930, %v1176
        %v1932 = vpop.permute.xlu0 %1931
        %v1933 = vlaneseq
        %v1934 = vshrl.u32 %v1933, 7
        %v1935 = vadd.s32 %v1934, 88
        %1936 = vset.pattern.permute.xlu0 %v1935
        %1937 = vperm.xlu0 %1936, %v1183
        %v1938 = vpop.permute.xlu0 %1937
        %v1939 = vlaneseq
        %v1940 = vshrl.u32 %v1939, 7
        %v1941 = vadd.s32 %v1940, 88
        %1942 = vset.pattern.permute.xlu0 %v1941
        %1943 = vperm.xlu0 %1942, %v1190
        %v1944 = vpop.permute.xlu0 %1943
        %v1945 = vlaneseq
        %v1946 = vshrl.u32 %v1945, 7
        %v1947 = vadd.s32 %v1946, 88
        %1948 = vset.pattern.permute.xlu0 %v1947
        %1949 = vperm.xlu0 %1948, %v1197
        %v1950 = vpop.permute.xlu0 %1949
        %v1951 = vlaneseq
        %v1952 = vshrl.u32 %v1951, 7
        %v1953 = vadd.s32 %v1952, 88
        %1954 = vset.pattern.permute.xlu0 %v1953
        %1955 = vperm.xlu0 %1954, %v1204
        %v1956 = vpop.permute.xlu0 %1955
        %v1957 = vlaneseq
        %v1958 = vshrl.u32 %v1957, 7
        %v1959 = vadd.s32 %v1958, 88
        %1960 = vset.pattern.permute.xlu0 %v1959
        %1961 = vperm.xlu0 %1960, %v1211
        %v1962 = vpop.permute.xlu0 %1961
        %v1963 = vmul.f32 %v1795, %v1920
        %v1964 = vmul.f32 %v1796, %v1926
        %v1965 = vmul.f32 %v1797, %v1932
        %v1966 = vmul.f32 %v1798, %v1938
        %v1967 = vmul.f32 %v1799, %v1944
        %v1968 = vmul.f32 %v1800, %v1950
        %v1969 = vmul.f32 %v1801, %v1956
        %v1970 = vmul.f32 %v1802, %v1962
        %v1971 = vsel %vm1639, %v1963, 0.0
        %v1972 = vrot.slane %v1971, 4
        %v1973 = vadd.f32 %v1971, %v1972
        %v1974 = vrot.slane %v1973, 2
        %v1975 = vadd.f32 %v1973, %v1974
        %v1976 = vrot.slane %v1975, 1
        %v1977 = vadd.f32 %v1975, %v1976
        %v1978 = vsel %vm1639, %v1964, 0.0
        %v1979 = vrot.slane %v1978, 4
        %v1980 = vadd.f32 %v1978, %v1979
        %v1981 = vrot.slane %v1980, 2
        %v1982 = vadd.f32 %v1980, %v1981
        %v1983 = vrot.slane %v1982, 1
        %v1984 = vadd.f32 %v1982, %v1983
        %v1985 = vsel %vm1639, %v1965, 0.0
        %v1986 = vrot.slane %v1985, 4
        %v1987 = vadd.f32 %v1985, %v1986
        %v1988 = vrot.slane %v1987, 2
        %v1989 = vadd.f32 %v1987, %v1988
        %v1990 = vrot.slane %v1989, 1
        %v1991 = vadd.f32 %v1989, %v1990
        %v1992 = vsel %vm1639, %v1966, 0.0
        %v1993 = vrot.slane %v1992, 4
        %v1994 = vadd.f32 %v1992, %v1993
        %v1995 = vrot.slane %v1994, 2
        %v1996 = vadd.f32 %v1994, %v1995
        %v1997 = vrot.slane %v1996, 1
        %v1998 = vadd.f32 %v1996, %v1997
        %v1999 = vsel %vm1639, %v1967, 0.0
        %v2000 = vrot.slane %v1999, 4
        %v2001 = vadd.f32 %v1999, %v2000
        %v2002 = vrot.slane %v2001, 2
        %v2003 = vadd.f32 %v2001, %v2002
        %v2004 = vrot.slane %v2003, 1
        %v2005 = vadd.f32 %v2003, %v2004
        %v2006 = vsel %vm1639, %v1968, 0.0
        %v2007 = vrot.slane %v2006, 4
        %v2008 = vadd.f32 %v2006, %v2007
        %v2009 = vrot.slane %v2008, 2
        %v2010 = vadd.f32 %v2008, %v2009
        %v2011 = vrot.slane %v2010, 1
        %v2012 = vadd.f32 %v2010, %v2011
        %v2013 = vsel %vm1639, %v1969, 0.0
        %v2014 = vrot.slane %v2013, 4
        %v2015 = vadd.f32 %v2013, %v2014
        %v2016 = vrot.slane %v2015, 2
        %v2017 = vadd.f32 %v2015, %v2016
        %v2018 = vrot.slane %v2017, 1
        %v2019 = vadd.f32 %v2017, %v2018
        %v2020 = vsel %vm1639, %v1970, 0.0
        %v2021 = vrot.slane %v2020, 4
        %v2022 = vadd.f32 %v2020, %v2021
        %v2023 = vrot.slane %v2022, 2
        %v2024 = vadd.f32 %v2022, %v2023
        %v2025 = vrot.slane %v2024, 1
        %v2026 = vadd.f32 %v2024, %v2025
        %2035 = vrot.lane.b32.xlu0 %v1977, 64
        %v2036 = vpop.permute.xlu0 %2035
        %2037 = vrot.lane.b32.xlu0 %v1984, 64
        %v2038 = vpop.permute.xlu0 %2037
        %2039 = vrot.lane.b32.xlu0 %v1991, 64
        %v2040 = vpop.permute.xlu0 %2039
        %2041 = vrot.lane.b32.xlu0 %v1998, 64
        %v2042 = vpop.permute.xlu0 %2041
        %2043 = vrot.lane.b32.xlu0 %v2005, 64
        %v2044 = vpop.permute.xlu0 %2043
        %2045 = vrot.lane.b32.xlu0 %v2012, 64
        %v2046 = vpop.permute.xlu0 %2045
        %2047 = vrot.lane.b32.xlu0 %v2019, 64
        %v2048 = vpop.permute.xlu0 %2047
        %2049 = vrot.lane.b32.xlu0 %v2026, 64
        %v2050 = vpop.permute.xlu0 %2049
        %v2059 = vadd.f32 %v1865, %v2036
        %v2060 = vadd.f32 %v1872, %v2038
        %v2061 = vadd.f32 %v1879, %v2040
        %v2062 = vadd.f32 %v1886, %v2042
        %v2063 = vadd.f32 %v1893, %v2044
        %v2064 = vadd.f32 %v1900, %v2046
        %v2065 = vadd.f32 %v1907, %v2048
        %v2066 = vadd.f32 %v1914, %v2050
        %v2067 = vmul.f32 %v1737, %v766
        %v2069 = vrot.slane %v2067, 1
        %v2070 = vrot.slane %v2067, 2
        %v2071 = vrot.slane %v2067, 3
        %v2072 = vrot.slane %v2067, 4
        %v2073 = vrot.slane %v2067, 5
        %v2074 = vrot.slane %v2067, 6
        %v2075 = vrot.slane %v2067, 7
        %v2084 = vadd.f32 %v2059, %v2067
        %v2085 = vadd.f32 %v2060, %v2069
        %v2086 = vadd.f32 %v2061, %v2070
        %v2087 = vadd.f32 %v2062, %v2071
        %v2088 = vadd.f32 %v2063, %v2072
        %v2089 = vadd.f32 %v2064, %v2073
        %v2090 = vadd.f32 %v2065, %v2074
        %v2091 = vadd.f32 %v2066, %v2075
        %v2100 = vrot.slane %v2085, 7
        %v2101 = vsel %vm1773, %v2100, %v2084
        %v2102 = vrot.slane %v2086, 6
        %v2103 = vsel %vm1776, %v2102, %v2101
        %v2104 = vrot.slane %v2087, 5
        %v2105 = vsel %vm1779, %v2104, %v2103
        %v2106 = vrot.slane %v2088, 4
        %v2107 = vsel %vm1782, %v2106, %v2105
        %v2108 = vrot.slane %v2089, 3
        %v2109 = vsel %vm1785, %v2108, %v2107
        %v2110 = vrot.slane %v2090, 2
        %v2111 = vsel %vm1788, %v2110, %v2109
        %v2112 = vrot.slane %v2091, 1
        %v2113 = vsel %vm1791, %v2112, %v2111
        %2115 = vst.msk [vmem:[#allocation5 + $0x8] sm:$0xff] %vm800, %v2113
        %v2116 = vld [vmem:[#allocation5] sm:$0xff]
        %v2117 = vld [vmem:[#allocation5 + $0x8] sm:$0xff]
        %v2118 = vxor.u32 %v633, 2147483648
        %v2119 = vxor.u32 %v635, 2147483648
        %v2120 = vmul.f32 %v2118, 1.442695
        %v2121 = vpow.pop %v2120
        %v2122 = vmul.f32 %v2119, 1.442695
        %v2123 = vpow.pop %v2122
        %v2124 = vadd.f32 %v2121, 1.0
        %v2125 = vadd.f32 %v2123, 1.0
        %v2126 = vrcp.pop %v2124
        %v2127 = vmul.f32 %v2124, %v2126
        %v2128 = vsub.f32 1.0, %v2127
        %v2129 = vmul.f32 %v2126, %v2128
        %v2130 = vadd.f32 %v2126, %v2129
        %vm2131 = vweird.f32 %v2124
        %vm2132 = vweird.f32 %v2126
        %vm2133 = vmor %vm2131, %vm2132
        %v2134 = vsel %vm2133, %v2126, %v2130
        %v2135 = vand.u32 2147483647, %v2124
        %vm2136 = vcmp.eq.f32.partialorder %v2135, 8.507059e+37
        %v2137 = vand.u32 %v2124, 2147483648
        %v2138 = vor.u32 1.1754944e-38, %v2137
        %v2139 = vsel %vm2136, %v2138, %v2134
        %v2140 = vmul.f32 1.0, %v2139
        %v2141 = vrcp.pop %v2125
        %v2142 = vmul.f32 %v2125, %v2141
        %v2143 = vsub.f32 1.0, %v2142
        %v2144 = vmul.f32 %v2141, %v2143
        %v2145 = vadd.f32 %v2141, %v2144
        %vm2146 = vweird.f32 %v2125
        %vm2147 = vweird.f32 %v2141
        %vm2148 = vmor %vm2146, %vm2147
        %v2149 = vsel %vm2148, %v2141, %v2145
        %v2150 = vand.u32 2147483647, %v2125
        %vm2151 = vcmp.eq.f32.partialorder %v2150, 8.507059e+37
        %v2152 = vand.u32 %v2125, 2147483648
        %v2153 = vor.u32 1.1754944e-38, %v2152
        %v2154 = vsel %vm2151, %v2153, %v2149
        %v2155 = vmul.f32 1.0, %v2154
        %v2156 = vmul.f32 %v633, %v2140
        %v2157 = vmul.f32 %v635, %v2155
        %2160 = vrot.lane.b32.xlu0 %v2156, 64
        %v2161 = vpop.permute.xlu0 %2160
        %2162 = vrot.lane.b32.xlu0 %v2157, 64
        %v2163 = vpop.permute.xlu0 %2162
        %v2166 = vmul.f32 %v2116, %v2161
        %v2167 = vmul.f32 %v2117, %v2163
        %v2168 = vpack.c.bf16 %v2167, %v2166
        %v2169 = vld [vmem:[%s541] sm:$0xf]
        %v2170 = vld [vmem:[%s541 + $0x4] sm:$0xf]
        %v2171 = vld [vmem:[%s541 + $0x8] sm:$0xf]
        %v2172 = vld [vmem:[%s541 + $0xc] sm:$0xf]
        %v2173 = vld [vmem:[%s541 + $0x10] sm:$0xf]
        %v2174 = vld [vmem:[%s541 + $0x14] sm:$0xf]
        %v2175 = vld [vmem:[%s541 + $0x18] sm:$0xf]
        %v2176 = vld [vmem:[%s541 + $0x1c] sm:$0xf]
        %v2185 = vunpack.c.l.b16 %v2169
        %v2186 = vunpack.c.l.b16 %v2170
        %v2187 = vunpack.c.l.b16 %v2171
        %v2188 = vunpack.c.l.b16 %v2172
        %v2189 = vunpack.c.l.b16 %v2173
        %v2190 = vunpack.c.l.b16 %v2174
        %v2191 = vunpack.c.l.b16 %v2175
        %v2192 = vunpack.c.l.b16 %v2176
        %v2193 = vpack.c.b16 %v2186, %v2185
        %v2194 = vpack.c.b16 %v2188, %v2187
        %v2195 = vpack.c.b16 %v2190, %v2189
        %v2196 = vpack.c.b16 %v2192, %v2191
        %v2202 = vsel %vm800, %v2168, 0
        %2204 = vmatpush.bf16.msra.mxu0 0
        %2205 = vmatpush.bf16.msra.mxu0 0
        %2206 = vmatpush.bf16.msra.mxu0 0
        %2207 = vmatpush.bf16.msra.mxu0 0
        %2208 = vmatpush.bf16.msra.mxu0 %v2196
        %2209 = vmatpush.bf16.msra.mxu0 %v2195
        %2210 = vmatpush.bf16.msra.mxu0 %v2194
        %2211 = vmatpush.bf16.msra.mxu0 %v2193
        %2212 = vmatmul.bf16.gmra.mxu0 %v2202
        %v2213 = vpop.f32.mrf.mxu0
        %v2214 = vadd.f32 0.0, %v2213
        %v2215 = vpop.f32.mrf.mxu0
        %v2216 = vadd.f32 0.0, %v2215
        %2217 = vdwg.mxu0
        %v2218 = vadd.f32 %v553, %v2214
        %v2219 = vadd.f32 %v554, %v2216
        %p2220 = scmp.eq.s32.totalorder %s28, 1
        %v2221 = vld [vmem:[%s10] sm:$0x1]
        %v2222 = vmul.f32 %v2218, %v2218
        %v2223 = vmul.f32 %v2219, %v2219
        %v2224 = vsel %vm558, %v2222, 0.0
        %2225 = vadd.xlane.f32.xlu0 %v2224
        %v2226 = vpop.xlane.xlu0 %2225
        %v2227 = vsel %vm558, %v2223, 0.0
        %2228 = vadd.xlane.f32.xlu0 %v2227
        %v2229 = vpop.xlane.xlu0 %2228
        %v2230 = vmul.f32 %v2226, %v571
        %v2231 = vmul.f32 %v2229, %v571
        %v2232 = vadd.f32 %v2230, 1e-05
        %v2233 = vadd.f32 %v2231, 1e-05
        %v2234 = vrsqrt.pop %v2232
        %v2235 = vmul.f32 %v2234, %v2232
        %v2236 = vmul.f32 %v2235, %v2234
        %v2237 = vmul.f32 0.5, %v2236
        %v2238 = vsub.f32 1.5, %v2237
        %v2239 = vmul.f32 %v2234, %v2238
        %vm2240 = vweird.f32 %v2232
        %vm2241 = vweird.f32 %v2234
        %vm2242 = vmor %vm2240, %vm2241
        %v2243 = vsel %vm2242, %v2234, %v2239
        %v2244 = vrsqrt.pop %v2233
        %v2245 = vmul.f32 %v2244, %v2233
        %v2246 = vmul.f32 %v2245, %v2244
        %v2247 = vmul.f32 0.5, %v2246
        %v2248 = vsub.f32 1.5, %v2247
        %v2249 = vmul.f32 %v2244, %v2248
        %vm2250 = vweird.f32 %v2233
        %vm2251 = vweird.f32 %v2244
        %vm2252 = vmor %vm2250, %vm2251
        %v2253 = vsel %vm2252, %v2244, %v2249
        %v2254 = vmul.f32 %v2218, %v2243
        %v2255 = vmul.f32 %v2219, %v2253
        %v2257 = vperm.slane %v2221, 0
        %v2259 = vmul.f32 %v2254, %v2257
        %v2260 = vmul.f32 %v2255, %v2257
        %s2261 = scalar_select %p2220, 1, 0
        %v2262 = vstv %s2261
        %vm2263 = vcmp.eq.s32.totalorder %v2262, 1
        %v2264 = vsel %vm2263, %v2259, %v2218
        %v2265 = vsel %vm2263, %v2260, %v2219
        %2266 = vst.msk [vmem:[#allocation6] sm:$0xff] %vm558, %v2264
        %2267 = vst.msk [vmem:[#allocation6 + $0x8] sm:$0xff] %vm558, %v2265
        // Predicated region
        $region69: #{mamba_model_forward.1} parent=63 // pred_check
          %p2268 = pneg %p334
        $region70: #{mamba_model_forward.1} parent=63 // pred_check_branch
          %2270 = sbr.rel (%p2268) target = $region72
        $region71: #{mamba_model_forward.1} parent=63 // pred_region
          %s2271 = smul.u32 2, %s27
          %2273 = vsyncadd [#allocation7], 0
          %s2274 = smul.addr %s2271, 8
          %s2275 = scalar_lea.hbm %s11, %s2274
          %s2276 = sshll.u32 [#allocation6], 4
          %s2277 = int_to_ptr.vmem [resolvable:$true] %s2276
          %s2278 = sshll.u32 %s2275, 4
          %s2279 = int_to_ptr.hbm [resolvable:$true] %s2278
          %2284 = dma.vmem_to_hbm [thread:$0]  %s2277, 256, %s2279, [#allocation7], 128, 128, 8
        $region72: #{mamba_model_forward.1} parent=63 // pred_fallthru
          _
        // Predicated region
        $region73: #{mamba_model_forward.1} parent=63 // pred_check
          %p2285 = pneg %p334
        $region74: #{mamba_model_forward.1} parent=63 // pred_check_branch
          %2287 = sbr.rel (%p2285) target = $region76
        $region75: #{mamba_model_forward.1} parent=63 // pred_region
          %2289 = dma.done [#allocation7], 256
        $region76: #{mamba_model_forward.1} parent=63 // pred_fallthru
          _
      $region64: #{mamba_model_forward.1} parent=5 // pred_fallthru
        _
      %p2290 = scmp.le.s32.totalorder 2, %s18
      // Predicated region
      $region77: #{mamba_model_forward.1} parent=5 // pred_check
        %p2291 = pneg %p2290
      $region78: #{mamba_model_forward.1} parent=5 // pred_check_branch
        %2293 = sbr.rel (%p2291) target = $region80
      $region79: #{mamba_model_forward.1} parent=5 // pred_region
        %s2294 = ssub.s32 %s18, 2
      $region80: #{mamba_model_forward.1} parent=5 // pred_fallthru
        _
    $region6: #{mamba_model_forward.1} parent=1 // loop_footer
      %s22 = sadd.s32 1, %s18
    $region7: #{mamba_model_forward.1} parent=1 // loop_footer_branch
      %17 = sbr.rel target = $region3
    $region8: #{mamba_model_forward.1} parent=1 // loop_exit
      _
    %2295 = vsyncpa [#allocation7], 1
    %s2296 = scalar_lea.sflag [#allocation7], 1
    %2297 = vsyncpa %s2296, 1

</llo_original>
